<compile_context>
chip_gen: v5e
topology: v5e:2x2
jax: 0.10.0
libtpu: 0.0.40
codegen_flags: <defaults>
</compile_context>

<pallas_src>
import jax
import jax.numpy as jnp
from jax import lax
from jax.experimental import pallas as pl
from jax.experimental.pallas import tpu as pltpu


def _round_up(n, m):
    return ((n + m - 1) // m) * m


# -----------------------------------------------------------------------------
# Kernel A: fused depthwise 3x3 convq + convk (padding=1) + pointwise W1 @ x
# -----------------------------------------------------------------------------
def _fused_qk_pw_conv(x, wq, bq, wk, bk, w1):
    """x: (B,C,H,W); wq/wk: (C,3,3); bq/bk: (C,); w1: (C,C).

    Returns (q, k, xw) as (B, C, lout) row-flattened slabs (row stride
    Wp = W+2); output pixel (i, j) lives at lane i*Wp + j for j < W.
    """
    B, C, H, W = x.shape
    Wp = W + 2
    lout = _round_up(H * Wp, 128)               # lane-dense output row-slab
    lin = _round_up(2 * Wp + 2 + lout, 128)     # covers every tap offset

    # pad once (shared by both convs), flatten rows so all 9 taps become
    # 1-D lane-offset slices of a lane-dense slab.
    xp = jnp.pad(x, ((0, 0), (0, 0), (1, 1), (1, 1))).reshape(B, C, (H + 2) * Wp)
    xf = jnp.pad(xp, ((0, 0), (0, 0), (0, lin - (H + 2) * Wp)))
    wq9 = wq.reshape(C, 9)
    wk9 = wk.reshape(C, 9)
    bq2 = bq.reshape(C, 1)
    bk2 = bk.reshape(C, 1)

    def kernel(xf_ref, wq_ref, wk_ref, bq_ref, bk_ref, w1_ref,
               q_ref, k_ref, xw_ref):
        # biases folded into the accumulator init (VALU-bound loop below).
        accq = jnp.broadcast_to(bq_ref[...], (C, lout))
        acck = jnp.broadcast_to(bk_ref[...], (C, lout))
        center = None
        for di in range(3):
            for dj in range(3):
                t = di * 3 + dj
                off = di * Wp + dj
                xs = xf_ref[:, off:off + lout]          # read once, use 2-3x
                accq = accq + xs * wq_ref[:, t:t + 1]   # per-channel broadcast
                acck = acck + xs * wk_ref[:, t:t + 1]
                if di == 1 and dj == 1:
                    center = xs                          # == unpadded x slab
        q_ref[...] = accq
        k_ref[...] = acck
        # 1x1 conv (self.conv) applied while x is already in VMEM; replaces
        # the kron(I16, W1) weight + dense (16C,16C) matmul of the old kernel B.
        xw_ref[...] = jnp.dot(w1_ref[...], center,
                              preferred_element_type=jnp.float32)

    q, k, xw = pl.pallas_call(
        kernel,
        out_shape=(
            jax.ShapeDtypeStruct((B, C, lout), jnp.float32),
            jax.ShapeDtypeStruct((B, C, lout), jnp.float32),
            jax.ShapeDtypeStruct((B, C, lout), jnp.float32),
        ),
        grid=(B,),
        in_specs=[
            pl.BlockSpec((None, C, lin), lambda b: (b, 0, 0)),
            pl.BlockSpec((C, 9), lambda b: (0, 0)),
            pl.BlockSpec((C, 9), lambda b: (0, 0)),
            pl.BlockSpec((C, 1), lambda b: (0, 0)),
            pl.BlockSpec((C, 1), lambda b: (0, 0)),
            pl.BlockSpec((C, C), lambda b: (0, 0)),
        ],
        out_specs=(
            pl.BlockSpec((None, C, lout), lambda b: (b, 0, 0)),
            pl.BlockSpec((None, C, lout), lambda b: (b, 0, 0)),
            pl.BlockSpec((None, C, lout), lambda b: (b, 0, 0)),
        ),
        compiler_params=pltpu.CompilerParams(
            dimension_semantics=("parallel",)),
    )(xf, wq9, wk9, bq2, bk2, w1)
    return q, k, xw


# -----------------------------------------------------------------------------
# Kernel B: batched attention + residual in the merged (L, 16C) layout
#           out = softmax(Q K^T) @ V' + V'      (V' already carries W1)
# -----------------------------------------------------------------------------
def _fused_attention(q_lc, k_lc, v_lc, num_chunks):
    """q/k/v_lc: (B, L, c).  Returns (B, L, c)."""
    B, L, c = q_lc.shape
    assert B % num_chunks == 0
    B_blk = B // num_chunks

    def kernel(q_ref, k_ref, v_ref, o_ref):
        q = q_ref[...]
        k = k_ref[...]
        v = v_ref[...]
        # S[b, i, j] = sum_c Q[b, i, c] K[b, j, c]  (softmax over j == dim=2)
        s = jnp.einsum("blc,bmc->blm", q, k,
                       preferred_element_type=jnp.float32)
        s = s - jnp.max(s, axis=-1, keepdims=True)
        p = jnp.exp(s)
        p = p * pl.reciprocal(jnp.sum(p, axis=-1, keepdims=True), approx=True)
        e = jnp.einsum("blm,bmc->blc", p, v,
                       preferred_element_type=jnp.float32)
        o_ref[...] = e + v          # residual + 1x1 conv already folded into v

    def blk():
        return pl.BlockSpec((B_blk, L, c), lambda i: (i, 0, 0))

    return pl.pallas_call(
        kernel,
        out_shape=jax.ShapeDtypeStruct((B, L, c), jnp.float32),
        grid=(num_chunks,),
        in_specs=[blk(), blk(), blk()],
        out_specs=blk(),
        compiler_params=pltpu.CompilerParams(
            dimension_semantics=("parallel",)),
    )(q_lc, k_lc, v_lc)


# -----------------------------------------------------------------------------
# Full forward (PMPA3_ave)
# -----------------------------------------------------------------------------
def pmpa3_ave_forward(x, params):
    B, C, H, W = x.shape
    assert H % 4 == 0 and W % 4 == 0
    h, w = H // 4, W // 4
    L = h * w
    cbig = 16 * C
    Wp = W + 2

    # (B, C, lout) slab -> double-PatchMerging transpose -> (B, L, 16C):
    #   pm2(t)[b, ((2*s2+r2)*4 + (2*s1+r1))*C + c, i, j] = t[b, c, 4i+2r2+r1, 4j+2s2+s1]
    def slab_to_lc(slab):
        t = slab[:, :, :H * Wp].reshape(B, C, H, Wp)[:, :, :, :W]
        t = t.reshape(B, C, h, 2, 2, w, 2, 2)      # (b, c, i, r2, r1, j, s2, s1)
        t = t.transpose(0, 2, 5, 6, 3, 7, 4, 1)    # (b, i, j, s2, r2, s1, r1, c)
        return t.reshape(B, L, cbig)

    # inverse shuffle == double Patch2Image
    def lc_to_p2i2(t):
        t = t.reshape(B, h, w, 2, 2, 2, 2, C)      # (b, i, j, s2, r2, s1, r1, o)
        t = t.transpose(0, 7, 1, 4, 6, 2, 3, 5)    # (b, o, i, r2, r1, j, s2, s1)
        return t.reshape(B, C, H, W)

    q_slab, k_slab, xw_slab = _fused_qk_pw_conv(
        x, params["wq"], params["bq"], params["wk"], params["bk"], params["w1"])

    q_lc = slab_to_lc(q_slab)
    k_lc = slab_to_lc(k_slab)
    v_lc = slab_to_lc(xw_slab)                     # V' = pm2(W1 @ x)

    # 2 parallel chunks keep both v7x TensorCores busy; on 1-TC chips they are
    # two cheap steps.  (For odd B fall back to one big step.)
    num_chunks = 2 if (B >= 2 and B % 2 == 0) else 1
    out_lc = _fused_attention(q_lc, k_lc, v_lc, num_chunks)
    return lc_to_p2i2(out_lc)


# -----------------------------------------------------------------------------
# Pure-JAX reference for validation
# -----------------------------------------------------------------------------
def patch_merging(x):
    x0 = x[:, :, 0::2, 0::2]
    x1 = x[:, :, 1::2, 0::2]
    x2 = x[:, :, 0::2, 1::2]
    x3 = x[:, :, 1::2, 1::2]
    return jnp.concatenate([x0, x1, x2, x3], axis=1)


def patch2image(x):
    B, C4, H, W = x.shape
    C = C4 // 4
    xr = jnp.zeros((B, C, 2 * H, 2 * W), x.dtype)
    xr = xr.at[:, :, 0::2, 0::2].set(x[:, 0:C])
    xr = xr.at[:, :, 1::2, 0::2].set(x[:, C:2 * C])
    xr = xr.at[:, :, 0::2, 1::2].set(x[:, 2 * C:3 * C])
    xr = xr.at[:, :, 1::2, 1::2].set(x[:, 3 * C:4 * C])
    return xr


def reference_forward(x, params):
    B, C, H, W = x.shape
    dn = ("NCHW", "OIHW", "NCHW")
    wq = params["wq"][:, None, :, :]
    wk = params["wk"][:, None, :, :]
    Q = lax.conv_general_dilated(x, wq, (1, 1), "SAME", dimension_numbers=dn,
                                 feature_group_count=C)
    Q = Q + params["bq"][None, :, None, None]
    K = lax.conv_general_dilated(x, wk, (1, 1), "SAME", dimension_numbers=dn,
                                 feature_group_count=C)
    K = K + params["bk"][None, :, None, None]
    Q = patch_merging(patch_merging(Q))
    K = patch_merging(patch_merging(K))
    V = patch_merging(patch_merging(x))
    b, c, h, w = V.shape
    Qf, Kf, Vf = (t.reshape(b, c, h * w) for t in (Q, K, V))
    S = jax.nn.softmax(jnp.einsum("bci,bcj->bij", Qf, Kf), axis=-1)
    E = jnp.einsum("bcj,bij->bci", Vf, S).reshape(b, c, h, w)
    E = patch2image(patch2image(E)) + x
    return jnp.einsum("oc,bchw->bohw", params["w1"], E)


if __name__ == "__main__":
    B, C, H, W = 2, 4, 16, 16  # in_channels = out_channels = 4
    key = jax.random.PRNGKey(0)
    kx, kwq, kbq, kwk, kbk, kw1 = jax.random.split(key, 6)
    x = jax.random.normal(kx, (B, C, H, W), jnp.float32)
    params = dict(
        wq=0.1 * jax.random.normal(kwq, (C, 3, 3), jnp.float32),
        bq=0.1 * jax.random.normal(kbq, (C,), jnp.float32),
        wk=0.1 * jax.random.normal(kwk, (C, 3, 3), jnp.float32),
        bk=0.1 * jax.random.normal(kbk, (C,), jnp.float32),
        w1=0.1 * jax.random.normal(kw1, (C, C), jnp.float32),
    )

    fwd = jax.jit(pmpa3_ave_forward)
    out = jax.block_until_ready(fwd(x, params))

    ref = reference_forward(x, params)
    assert out.shape == (B, C, H, W)
    max_err = float(jnp.max(jnp.abs(out - ref)))
    assert jnp.allclose(out, ref, atol=1e-3, rtol=1e-3), max_err
    print("KERNEL_OK")
</pallas_src>

<mosaic_0001>
module attributes {stable_mosaic.version = 11 : i64} {
  func.func @kernel(%arg0: i32, %arg1: memref<1x4x512xf32, #tpu.memory_space<vmem>>, %arg2: memref<4x9xf32, #tpu.memory_space<vmem>>, %arg3: memref<4x9xf32, #tpu.memory_space<vmem>>, %arg4: memref<4x1xf32, #tpu.memory_space<vmem>>, %arg5: memref<4x1xf32, #tpu.memory_space<vmem>>, %arg6: memref<4x4xf32, #tpu.memory_space<vmem>>, %arg7: memref<1x4x384xf32, #tpu.memory_space<vmem>>, %arg8: memref<1x4x384xf32, #tpu.memory_space<vmem>>, %arg9: memref<1x4x384xf32, #tpu.memory_space<vmem>>) attributes {dimension_semantics = [#tpu.dimension_semantics<parallel>], iteration_bounds = array<i64: 2>, scalar_prefetch = 0 : i64, scratch_operands = 0 : i64, tpu.core_type = #tpu.core_type<tc>, window_params = [{transform_indices = @transform_0, window_bounds = array<i64: 1, 4, 512>}, {pipeline_mode = #tpu.pipeline_mode<synchronous>, transform_indices = @transform_1, window_bounds = array<i64: 4, 9>}, {pipeline_mode = #tpu.pipeline_mode<synchronous>, transform_indices = @transform_2, window_bounds = array<i64: 4, 9>}, {pipeline_mode = #tpu.pipeline_mode<synchronous>, transform_indices = @transform_3, window_bounds = array<i64: 4, 1>}, {pipeline_mode = #tpu.pipeline_mode<synchronous>, transform_indices = @transform_4, window_bounds = array<i64: 4, 1>}, {pipeline_mode = #tpu.pipeline_mode<synchronous>, transform_indices = @transform_5, window_bounds = array<i64: 4, 4>}, {transform_indices = @transform_6, window_bounds = array<i64: 1, 4, 384>}, {transform_indices = @transform_7, window_bounds = array<i64: 1, 4, 384>}, {transform_indices = @transform_8, window_bounds = array<i64: 1, 4, 384>}]} {
    %c0 = arith.constant 0 : index
    %c0_0 = arith.constant 0 : index
    %0 = vector.load %arg4[%c0, %c0_0] : memref<4x1xf32, #tpu.memory_space<vmem>>, vector<4x1xf32>
    %1 = vector.shape_cast %0 : vector<4x1xf32> to vector<4x1xf32>
    %2 = vector.broadcast %1 : vector<4x1xf32> to vector<4x384xf32>
    %c0_1 = arith.constant 0 : index
    %c0_2 = arith.constant 0 : index
    %3 = vector.load %arg5[%c0_1, %c0_2] : memref<4x1xf32, #tpu.memory_space<vmem>>, vector<4x1xf32>
    %4 = vector.shape_cast %3 : vector<4x1xf32> to vector<4x1xf32>
    %5 = vector.broadcast %4 : vector<4x1xf32> to vector<4x384xf32>
    %c0_3 = arith.constant 0 : index
    %c0_4 = arith.constant 0 : index
    %c0_5 = arith.constant 0 : index
    %6 = vector.load %arg1[%c0_3, %c0_4, %c0_5] : memref<1x4x512xf32, #tpu.memory_space<vmem>>, vector<1x4x384xf32>
    %7 = vector.shape_cast %6 : vector<1x4x384xf32> to vector<4x384xf32>
    %c0_6 = arith.constant 0 : index
    %c0_7 = arith.constant 0 : index
    %8 = vector.load %arg2[%c0_6, %c0_7] : memref<4x9xf32, #tpu.memory_space<vmem>>, vector<4x1xf32>
    %9 = vector.broadcast %8 : vector<4x1xf32> to vector<4x384xf32>
    %10 = arith.mulf %7, %9 : vector<4x384xf32>
    %11 = arith.addf %2, %10 : vector<4x384xf32>
    %c0_8 = arith.constant 0 : index
    %c0_9 = arith.constant 0 : index
    %12 = vector.load %arg3[%c0_8, %c0_9] : memref<4x9xf32, #tpu.memory_space<vmem>>, vector<4x1xf32>
    %13 = vector.broadcast %12 : vector<4x1xf32> to vector<4x384xf32>
    %14 = arith.mulf %7, %13 : vector<4x384xf32>
    %15 = arith.addf %5, %14 : vector<4x384xf32>
    %c0_10 = arith.constant 0 : index
    %c0_11 = arith.constant 0 : index
    %c1 = arith.constant 1 : index
    %16 = vector.load %arg1[%c0_10, %c0_11, %c1] : memref<1x4x512xf32, #tpu.memory_space<vmem>>, vector<1x4x384xf32>
    %17 = vector.shape_cast %16 : vector<1x4x384xf32> to vector<4x384xf32>
    %c0_12 = arith.constant 0 : index
    %c1_13 = arith.constant 1 : index
    %18 = vector.load %arg2[%c0_12, %c1_13] : memref<4x9xf32, #tpu.memory_space<vmem>>, vector<4x1xf32>
    %19 = vector.broadcast %18 : vector<4x1xf32> to vector<4x384xf32>
    %20 = arith.mulf %17, %19 : vector<4x384xf32>
    %21 = arith.addf %11, %20 : vector<4x384xf32>
    %c0_14 = arith.constant 0 : index
    %c1_15 = arith.constant 1 : index
    %22 = vector.load %arg3[%c0_14, %c1_15] : memref<4x9xf32, #tpu.memory_space<vmem>>, vector<4x1xf32>
    %23 = vector.broadcast %22 : vector<4x1xf32> to vector<4x384xf32>
    %24 = arith.mulf %17, %23 : vector<4x384xf32>
    %25 = arith.addf %15, %24 : vector<4x384xf32>
    %c0_16 = arith.constant 0 : index
    %c0_17 = arith.constant 0 : index
    %c2 = arith.constant 2 : index
    %26 = vector.load %arg1[%c0_16, %c0_17, %c2] : memref<1x4x512xf32, #tpu.memory_space<vmem>>, vector<1x4x384xf32>
    %27 = vector.shape_cast %26 : vector<1x4x384xf32> to vector<4x384xf32>
    %c0_18 = arith.constant 0 : index
    %c2_19 = arith.constant 2 : index
    %28 = vector.load %arg2[%c0_18, %c2_19] : memref<4x9xf32, #tpu.memory_space<vmem>>, vector<4x1xf32>
    %29 = vector.broadcast %28 : vector<4x1xf32> to vector<4x384xf32>
    %30 = arith.mulf %27, %29 : vector<4x384xf32>
    %31 = arith.addf %21, %30 : vector<4x384xf32>
    %c0_20 = arith.constant 0 : index
    %c2_21 = arith.constant 2 : index
    %32 = vector.load %arg3[%c0_20, %c2_21] : memref<4x9xf32, #tpu.memory_space<vmem>>, vector<4x1xf32>
    %33 = vector.broadcast %32 : vector<4x1xf32> to vector<4x384xf32>
    %34 = arith.mulf %27, %33 : vector<4x384xf32>
    %35 = arith.addf %25, %34 : vector<4x384xf32>
    %c0_22 = arith.constant 0 : index
    %c0_23 = arith.constant 0 : index
    %c18 = arith.constant 18 : index
    %36 = vector.load %arg1[%c0_22, %c0_23, %c18] : memref<1x4x512xf32, #tpu.memory_space<vmem>>, vector<1x4x384xf32>
    %37 = vector.shape_cast %36 : vector<1x4x384xf32> to vector<4x384xf32>
    %c0_24 = arith.constant 0 : index
    %c3 = arith.constant 3 : index
    %38 = vector.load %arg2[%c0_24, %c3] : memref<4x9xf32, #tpu.memory_space<vmem>>, vector<4x1xf32>
    %39 = vector.broadcast %38 : vector<4x1xf32> to vector<4x384xf32>
    %40 = arith.mulf %37, %39 : vector<4x384xf32>
    %41 = arith.addf %31, %40 : vector<4x384xf32>
    %c0_25 = arith.constant 0 : index
    %c3_26 = arith.constant 3 : index
    %42 = vector.load %arg3[%c0_25, %c3_26] : memref<4x9xf32, #tpu.memory_space<vmem>>, vector<4x1xf32>
    %43 = vector.broadcast %42 : vector<4x1xf32> to vector<4x384xf32>
    %44 = arith.mulf %37, %43 : vector<4x384xf32>
    %45 = arith.addf %35, %44 : vector<4x384xf32>
    %c0_27 = arith.constant 0 : index
    %c0_28 = arith.constant 0 : index
    %c19 = arith.constant 19 : index
    %46 = vector.load %arg1[%c0_27, %c0_28, %c19] : memref<1x4x512xf32, #tpu.memory_space<vmem>>, vector<1x4x384xf32>
    %47 = vector.shape_cast %46 : vector<1x4x384xf32> to vector<4x384xf32>
    %c0_29 = arith.constant 0 : index
    %c4 = arith.constant 4 : index
    %48 = vector.load %arg2[%c0_29, %c4] : memref<4x9xf32, #tpu.memory_space<vmem>>, vector<4x1xf32>
    %49 = vector.broadcast %48 : vector<4x1xf32> to vector<4x384xf32>
    %50 = arith.mulf %47, %49 : vector<4x384xf32>
    %51 = arith.addf %41, %50 : vector<4x384xf32>
    %c0_30 = arith.constant 0 : index
    %c4_31 = arith.constant 4 : index
    %52 = vector.load %arg3[%c0_30, %c4_31] : memref<4x9xf32, #tpu.memory_space<vmem>>, vector<4x1xf32>
    %53 = vector.broadcast %52 : vector<4x1xf32> to vector<4x384xf32>
    %54 = arith.mulf %47, %53 : vector<4x384xf32>
    %55 = arith.addf %45, %54 : vector<4x384xf32>
    %c0_32 = arith.constant 0 : index
    %c0_33 = arith.constant 0 : index
    %c20 = arith.constant 20 : index
    %56 = vector.load %arg1[%c0_32, %c0_33, %c20] : memref<1x4x512xf32, #tpu.memory_space<vmem>>, vector<1x4x384xf32>
    %57 = vector.shape_cast %56 : vector<1x4x384xf32> to vector<4x384xf32>
    %c0_34 = arith.constant 0 : index
    %c5 = arith.constant 5 : index
    %58 = vector.load %arg2[%c0_34, %c5] : memref<4x9xf32, #tpu.memory_space<vmem>>, vector<4x1xf32>
    %59 = vector.broadcast %58 : vector<4x1xf32> to vector<4x384xf32>
    %60 = arith.mulf %57, %59 : vector<4x384xf32>
    %61 = arith.addf %51, %60 : vector<4x384xf32>
    %c0_35 = arith.constant 0 : index
    %c5_36 = arith.constant 5 : index
    %62 = vector.load %arg3[%c0_35, %c5_36] : memref<4x9xf32, #tpu.memory_space<vmem>>, vector<4x1xf32>
    %63 = vector.broadcast %62 : vector<4x1xf32> to vector<4x384xf32>
    %64 = arith.mulf %57, %63 : vector<4x384xf32>
    %65 = arith.addf %55, %64 : vector<4x384xf32>
    %c0_37 = arith.constant 0 : index
    %c0_38 = arith.constant 0 : index
    %c36 = arith.constant 36 : index
    %66 = vector.load %arg1[%c0_37, %c0_38, %c36] : memref<1x4x512xf32, #tpu.memory_space<vmem>>, vector<1x4x384xf32>
    %67 = vector.shape_cast %66 : vector<1x4x384xf32> to vector<4x384xf32>
    %c0_39 = arith.constant 0 : index
    %c6 = arith.constant 6 : index
    %68 = vector.load %arg2[%c0_39, %c6] : memref<4x9xf32, #tpu.memory_space<vmem>>, vector<4x1xf32>
    %69 = vector.broadcast %68 : vector<4x1xf32> to vector<4x384xf32>
    %70 = arith.mulf %67, %69 : vector<4x384xf32>
    %71 = arith.addf %61, %70 : vector<4x384xf32>
    %c0_40 = arith.constant 0 : index
    %c6_41 = arith.constant 6 : index
    %72 = vector.load %arg3[%c0_40, %c6_41] : memref<4x9xf32, #tpu.memory_space<vmem>>, vector<4x1xf32>
    %73 = vector.broadcast %72 : vector<4x1xf32> to vector<4x384xf32>
    %74 = arith.mulf %67, %73 : vector<4x384xf32>
    %75 = arith.addf %65, %74 : vector<4x384xf32>
    %c0_42 = arith.constant 0 : index
    %c0_43 = arith.constant 0 : index
    %c37 = arith.constant 37 : index
    %76 = vector.load %arg1[%c0_42, %c0_43, %c37] : memref<1x4x512xf32, #tpu.memory_space<vmem>>, vector<1x4x384xf32>
    %77 = vector.shape_cast %76 : vector<1x4x384xf32> to vector<4x384xf32>
    %c0_44 = arith.constant 0 : index
    %c7 = arith.constant 7 : index
    %78 = vector.load %arg2[%c0_44, %c7] : memref<4x9xf32, #tpu.memory_space<vmem>>, vector<4x1xf32>
    %79 = vector.broadcast %78 : vector<4x1xf32> to vector<4x384xf32>
    %80 = arith.mulf %77, %79 : vector<4x384xf32>
    %81 = arith.addf %71, %80 : vector<4x384xf32>
    %c0_45 = arith.constant 0 : index
    %c7_46 = arith.constant 7 : index
    %82 = vector.load %arg3[%c0_45, %c7_46] : memref<4x9xf32, #tpu.memory_space<vmem>>, vector<4x1xf32>
    %83 = vector.broadcast %82 : vector<4x1xf32> to vector<4x384xf32>
    %84 = arith.mulf %77, %83 : vector<4x384xf32>
    %85 = arith.addf %75, %84 : vector<4x384xf32>
    %c0_47 = arith.constant 0 : index
    %c0_48 = arith.constant 0 : index
    %c38 = arith.constant 38 : index
    %86 = vector.load %arg1[%c0_47, %c0_48, %c38] : memref<1x4x512xf32, #tpu.memory_space<vmem>>, vector<1x4x384xf32>
    %87 = vector.shape_cast %86 : vector<1x4x384xf32> to vector<4x384xf32>
    %c0_49 = arith.constant 0 : index
    %c8 = arith.constant 8 : index
    %88 = vector.load %arg2[%c0_49, %c8] : memref<4x9xf32, #tpu.memory_space<vmem>>, vector<4x1xf32>
    %89 = vector.broadcast %88 : vector<4x1xf32> to vector<4x384xf32>
    %90 = arith.mulf %87, %89 : vector<4x384xf32>
    %91 = arith.addf %81, %90 : vector<4x384xf32>
    %c0_50 = arith.constant 0 : index
    %c8_51 = arith.constant 8 : index
    %92 = vector.load %arg3[%c0_50, %c8_51] : memref<4x9xf32, #tpu.memory_space<vmem>>, vector<4x1xf32>
    %93 = vector.broadcast %92 : vector<4x1xf32> to vector<4x384xf32>
    %94 = arith.mulf %87, %93 : vector<4x384xf32>
    %95 = arith.addf %85, %94 : vector<4x384xf32>
    %c0_52 = arith.constant 0 : index
    %c0_53 = arith.constant 0 : index
    %c0_54 = arith.constant 0 : index
    %96 = vector.load %arg7[%c0_52, %c0_53, %c0_54] : memref<1x4x384xf32, #tpu.memory_space<vmem>>, vector<1x4x384xf32>
    %97 = vector.shape_cast %96 : vector<1x4x384xf32> to vector<4x384xf32>
    %98 = vector.shape_cast %91 : vector<4x384xf32> to vector<1x4x384xf32>
    tpu.vector_store %arg7[%c0_52, %c0_53, %c0_54], %98 {strides = array<i32>} : memref<1x4x384xf32, #tpu.memory_space<vmem>>, vector<1x4x384xf32>,
    %c0_55 = arith.constant 0 : index
    %c0_56 = arith.constant 0 : index
    %c0_57 = arith.constant 0 : index
    %99 = vector.load %arg8[%c0_55, %c0_56, %c0_57] : memref<1x4x384xf32, #tpu.memory_space<vmem>>, vector<1x4x384xf32>
    %100 = vector.shape_cast %99 : vector<1x4x384xf32> to vector<4x384xf32>
    %101 = vector.shape_cast %95 : vector<4x384xf32> to vector<1x4x384xf32>
    tpu.vector_store %arg8[%c0_55, %c0_56, %c0_57], %101 {strides = array<i32>} : memref<1x4x384xf32, #tpu.memory_space<vmem>>, vector<1x4x384xf32>,
    %c0_58 = arith.constant 0 : index
    %c0_59 = arith.constant 0 : index
    %102 = vector.load %arg6[%c0_58, %c0_59] : memref<4x4xf32, #tpu.memory_space<vmem>>, vector<4x4xf32>
    %cst = arith.constant dense<0.000000e+00> : vector<4x384xf32>
    %103 = tpu.matmul %102, %47, %cst {dimension_numbers = #tpu.dot_dimension_numbers<[1], [0], [0], [1], [0, 0, 1, 1], [], []>} : vector<4x4xf32>, vector<4x384xf32>, vector<4x384xf32> -> vector<4x384xf32>
    %c0_60 = arith.constant 0 : index
    %c0_61 = arith.constant 0 : index
    %c0_62 = arith.constant 0 : index
    %104 = vector.load %arg9[%c0_60, %c0_61, %c0_62] : memref<1x4x384xf32, #tpu.memory_space<vmem>>, vector<1x4x384xf32>
    %105 = vector.shape_cast %104 : vector<1x4x384xf32> to vector<4x384xf32>
    %106 = vector.shape_cast %103 : vector<4x384xf32> to vector<1x4x384xf32>
    tpu.vector_store %arg9[%c0_60, %c0_61, %c0_62], %106 {strides = array<i32>} : memref<1x4x384xf32, #tpu.memory_space<vmem>>, vector<1x4x384xf32>,
    return
  }
  func.func @transform_0(%arg0: i32) -> (i32, i32, i32) {
    %c0_i32 = arith.constant 0 : i32
    %c0_i32_0 = arith.constant 0 : i32
    %c0_i32_1 = arith.constant 0 : i32
    return %arg0, %c0_i32, %c0_i32_0 : i32, i32, i32
  }
  func.func @transform_1(%arg0: i32) -> (i32, i32) {
    %c0_i32 = arith.constant 0 : i32
    %c0_i32_0 = arith.constant 0 : i32
    %c0_i32_1 = arith.constant 0 : i32
    return %c0_i32, %c0_i32_0 : i32, i32
  }
  func.func @transform_2(%arg0: i32) -> (i32, i32) {
    %c0_i32 = arith.constant 0 : i32
    %c0_i32_0 = arith.constant 0 : i32
    %c0_i32_1 = arith.constant 0 : i32
    return %c0_i32, %c0_i32_0 : i32, i32
  }
  func.func @transform_3(%arg0: i32) -> (i32, i32) {
    %c0_i32 = arith.constant 0 : i32
    %c0_i32_0 = arith.constant 0 : i32
    %c0_i32_1 = arith.constant 0 : i32
    return %c0_i32, %c0_i32_0 : i32, i32
  }
  func.func @transform_4(%arg0: i32) -> (i32, i32) {
    %c0_i32 = arith.constant 0 : i32
    %c0_i32_0 = arith.constant 0 : i32
    %c0_i32_1 = arith.constant 0 : i32
    return %c0_i32, %c0_i32_0 : i32, i32
  }
  func.func @transform_5(%arg0: i32) -> (i32, i32) {
    %c0_i32 = arith.constant 0 : i32
    %c0_i32_0 = arith.constant 0 : i32
    %c0_i32_1 = arith.constant 0 : i32
    return %c0_i32, %c0_i32_0 : i32, i32
  }
  func.func @transform_6(%arg0: i32) -> (i32, i32, i32) {
    %c0_i32 = arith.constant 0 : i32
    %c0_i32_0 = arith.constant 0 : i32
    %c0_i32_1 = arith.constant 0 : i32
    return %arg0, %c0_i32, %c0_i32_0 : i32, i32, i32
  }
  func.func @transform_7(%arg0: i32) -> (i32, i32, i32) {
    %c0_i32 = arith.constant 0 : i32
    %c0_i32_0 = arith.constant 0 : i32
    %c0_i32_1 = arith.constant 0 : i32
    return %arg0, %c0_i32, %c0_i32_0 : i32, i32, i32
  }
  func.func @transform_8(%arg0: i32) -> (i32, i32, i32) {
    %c0_i32 = arith.constant 0 : i32
    %c0_i32_0 = arith.constant 0 : i32
    %c0_i32_1 = arith.constant 0 : i32
    return %arg0, %c0_i32, %c0_i32_0 : i32, i32, i32
  }
}

module attributes {stable_mosaic.version = 11 : i64} {
  func.func @kernel(%arg0: i32, %arg1: memref<1x16x64xf32, #tpu.memory_space<vmem>>, %arg2: memref<1x16x64xf32, #tpu.memory_space<vmem>>, %arg3: memref<1x16x64xf32, #tpu.memory_space<vmem>>, %arg4: memref<1x16x64xf32, #tpu.memory_space<vmem>>) attributes {dimension_semantics = [#tpu.dimension_semantics<parallel>], iteration_bounds = array<i64: 2>, scalar_prefetch = 0 : i64, scratch_operands = 0 : i64, tpu.core_type = #tpu.core_type<tc>, window_params = [{transform_indices = @transform_0, window_bounds = array<i64: 1, 16, 64>}, {transform_indices = @transform_1, window_bounds = array<i64: 1, 16, 64>}, {transform_indices = @transform_2, window_bounds = array<i64: 1, 16, 64>}, {transform_indices = @transform_3, window_bounds = array<i64: 1, 16, 64>}]} {
    %c0 = arith.constant 0 : index
    %c0_0 = arith.constant 0 : index
    %c0_1 = arith.constant 0 : index
    %0 = vector.load %arg1[%c0, %c0_0, %c0_1] : memref<1x16x64xf32, #tpu.memory_space<vmem>>, vector<1x16x64xf32>
    %c0_2 = arith.constant 0 : index
    %c0_3 = arith.constant 0 : index
    %c0_4 = arith.constant 0 : index
    %1 = vector.load %arg2[%c0_2, %c0_3, %c0_4] : memref<1x16x64xf32, #tpu.memory_space<vmem>>, vector<1x16x64xf32>
    %c0_5 = arith.constant 0 : index
    %c0_6 = arith.constant 0 : index
    %c0_7 = arith.constant 0 : index
    %2 = vector.load %arg3[%c0_5, %c0_6, %c0_7] : memref<1x16x64xf32, #tpu.memory_space<vmem>>, vector<1x16x64xf32>
    "tpu.trace_start"() <{level = 10 : i32, message = "blc,bmc->blm"}> : () -> ()
    %cst = arith.constant dense<0.000000e+00> : vector<1x16x16xf32>
    %3 = tpu.matmul %0, %1, %cst {dimension_numbers = #tpu.dot_dimension_numbers<[2], [2], [1], [1], [0, 0, 0, 1, 1, 1], [0], [0]>} : vector<1x16x64xf32>, vector<1x16x64xf32>, vector<1x16x16xf32> -> vector<1x16x16xf32>
    "tpu.trace_stop"() : () -> ()
    %cst_8 = arith.constant dense<0xFF800000> : vector<1x16xf32>
    %4 = vector.multi_reduction <maximumf>, %3, %cst_8 [2] : vector<1x16x16xf32> to vector<1x16xf32>
    %5 = vector.shape_cast %4 : vector<1x16xf32> to vector<1x16x1xf32>
    %6 = vector.broadcast %5 : vector<1x16x1xf32> to vector<1x16x16xf32>
    %7 = arith.subf %3, %6 : vector<1x16x16xf32>
    %8 = math.exp %7 : vector<1x16x16xf32>
    %cst_9 = arith.constant dense<0.000000e+00> : vector<1x16xf32>
    %9 = vector.multi_reduction <add>, %8, %cst_9 [2] : vector<1x16x16xf32> to vector<1x16xf32>
    %10 = vector.shape_cast %9 : vector<1x16xf32> to vector<1x16x1xf32>
    %11 = tpu.reciprocal %10 {approx = true} : vector<1x16x1xf32> -> vector<1x16x1xf32>
    %12 = vector.broadcast %11 : vector<1x16x1xf32> to vector<1x16x16xf32>
    %13 = arith.mulf %8, %12 : vector<1x16x16xf32>
    "tpu.trace_start"() <{level = 10 : i32, message = "blm,bmc->blc"}> : () -> ()
    %cst_10 = arith.constant dense<0.000000e+00> : vector<1x16x64xf32>
    %14 = tpu.matmul %13, %2, %cst_10 {dimension_numbers = #tpu.dot_dimension_numbers<[2], [1], [1], [2], [0, 0, 0, 1, 1, 2], [0], [0]>} : vector<1x16x16xf32>, vector<1x16x64xf32>, vector<1x16x64xf32> -> vector<1x16x64xf32>
    "tpu.trace_stop"() : () -> ()
    %15 = arith.addf %14, %2 : vector<1x16x64xf32>
    %c0_11 = arith.constant 0 : index
    %c0_12 = arith.constant 0 : index
    %c0_13 = arith.constant 0 : index
    %16 = vector.load %arg4[%c0_11, %c0_12, %c0_13] : memref<1x16x64xf32, #tpu.memory_space<vmem>>, vector<1x16x64xf32>
    tpu.vector_store %arg4[%c0_11, %c0_12, %c0_13], %15 {strides = array<i32>} : memref<1x16x64xf32, #tpu.memory_space<vmem>>, vector<1x16x64xf32>,
    return
  }
  func.func @transform_0(%arg0: i32) -> (i32, i32, i32) {
    %c0_i32 = arith.constant 0 : i32
    %c0_i32_0 = arith.constant 0 : i32
    %c0_i32_1 = arith.constant 0 : i32
    return %arg0, %c0_i32, %c0_i32_0 : i32, i32, i32
  }
  func.func @transform_1(%arg0: i32) -> (i32, i32, i32) {
    %c0_i32 = arith.constant 0 : i32
    %c0_i32_0 = arith.constant 0 : i32
    %c0_i32_1 = arith.constant 0 : i32
    return %arg0, %c0_i32, %c0_i32_0 : i32, i32, i32
  }
  func.func @transform_2(%arg0: i32) -> (i32, i32, i32) {
    %c0_i32 = arith.constant 0 : i32
    %c0_i32_0 = arith.constant 0 : i32
    %c0_i32_1 = arith.constant 0 : i32
    return %arg0, %c0_i32, %c0_i32_0 : i32, i32, i32
  }
  func.func @transform_3(%arg0: i32) -> (i32, i32, i32) {
    %c0_i32 = arith.constant 0 : i32
    %c0_i32_0 = arith.constant 0 : i32
    %c0_i32_1 = arith.constant 0 : i32
    return %arg0, %c0_i32, %c0_i32_0 : i32, i32, i32
  }
}

</mosaic_0001>

<llo_original>
// kernel: pmpa3_ave_forward.3
$region0: #{pmpa3_ave_forward.3}
  #allocation0 [shape = 'u32[]', space=smem, size = 0x4, offset = 0x4, fixed_abs, tag = 'smem constant byte address 0x4 - core index']
  #allocation1 [shape = 'u32[72,128]{1,0:T(1,128)}', space=vmem, size = 0x9000, scoped, tag = 'internal scratch']
  %s0 = inlined_call_operand.vmem [shape: f32[2,16,64], index: 0, kind: input, shape index: {}]
  %s1 = inlined_call_operand.vmem [shape: f32[2,16,64], index: 1, kind: input, shape index: {}]
  %s2 = inlined_call_operand.vmem [shape: f32[2,16,64], index: 2, kind: input, shape index: {}]
  %s3 = inlined_call_operand.vmem [shape: f32[2,16,64], index: 3, kind: output, shape index: {}]
  %s4 = sld [smem:[#allocation0]]
  $region45: #{pmpa3_ave_forward.3} parent=0
    _
  %s6 = ssub.s32 1, %s4
  %s7 = scalar_select 0, %s6, %s4
  loop: start=0, step=1, limit=4
  $region2: #{pmpa3_ave_forward.3} parent=0 // loop_pre_header
    _
  $region3: #{pmpa3_ave_forward.3} parent=0 // loop_header
    %s9 = sphi 0, %s13
    %p10 = scmp.ge.s32.totalorder %s9, 4
    %s19 = sphi 0, %s21
    %s22 = sphi 0, %s19
    %s23 = sphi 0, %s22
    %s39 = sphi 0, %s23
    %s45 = sphi 0, %s47
    %s48 = sphi 0, %s45
    %s49 = sphi 0, %s48
    %s65 = sphi 0, %s49
    %s71 = sphi 0, %s73
    %s74 = sphi 0, %s71
    %s75 = sphi 0, %s74
    %s91 = sphi 0, %s75
    %s97 = sphi 0, %s99
    %s100 = sphi 0, %s97
    %s101 = sphi 0, %s100
    %s117 = sphi 0, %s101
  $region4: #{pmpa3_ave_forward.3} parent=0 // loop_header_branch
    %12 = sbr.rel (%p10) target = $region8
  $region5: #{pmpa3_ave_forward.3} parent=0 // loop_body
    %s14 = ssub.s32 %s9, 1
    %s15 = ssub.s32 %s9, 2
    %s16 = sadd.s32 %s9, 1
    %s17 = ssub.s32 %s9, %s16
    %p18 = scmp.eq.s32.totalorder %s17, 0
    %s20 = sadd.s32 %s19, 1
    %s21 = scalar_select %p18, %s19, %s20
    %p24 = pneg %p18
    %p25 = scmp.eq.s32.totalorder %s9, 1
    %p26 = por %p24, %p25
    %p27 = scmp.ne.s32.totalorder %s19, %s22
    %p28 = scmp.eq.s32.totalorder %s9, 0
    %p29 = por %p27, %p28
    %p30 = scmp.ne.s32.totalorder %s19, %s22
    %p31 = scmp.eq.s32.totalorder %s14, 1
    %p32 = por %p30, %p31
    %p33 = scmp.ne.s32.totalorder %s22, %s23
    %p34 = scmp.eq.s32.totalorder %s14, 0
    %p35 = por %p33, %p34
    %p36 = scmp.ne.s32.totalorder %s22, %s23
    %p37 = scmp.eq.s32.totalorder %s15, 1
    %p38 = por %p36, %p37
    %p40 = scmp.ne.s32.totalorder %s23, %s39
    %p41 = scmp.eq.s32.totalorder %s15, 0
    %p42 = por %p40, %p41
    %s43 = ssub.s32 %s9, %s16
    %p44 = scmp.eq.s32.totalorder %s43, 0
    %s46 = sadd.s32 %s45, 1
    %s47 = scalar_select %p44, %s45, %s46
    %p50 = pneg %p44
    %p51 = scmp.eq.s32.totalorder %s9, 1
    %p52 = por %p50, %p51
    %p53 = scmp.ne.s32.totalorder %s45, %s48
    %p54 = scmp.eq.s32.totalorder %s9, 0
    %p55 = por %p53, %p54
    %p56 = scmp.ne.s32.totalorder %s45, %s48
    %p57 = scmp.eq.s32.totalorder %s14, 1
    %p58 = por %p56, %p57
    %p59 = scmp.ne.s32.totalorder %s48, %s49
    %p60 = scmp.eq.s32.totalorder %s14, 0
    %p61 = por %p59, %p60
    %p62 = scmp.ne.s32.totalorder %s48, %s49
    %p63 = scmp.eq.s32.totalorder %s15, 1
    %p64 = por %p62, %p63
    %p66 = scmp.ne.s32.totalorder %s49, %s65
    %p67 = scmp.eq.s32.totalorder %s15, 0
    %p68 = por %p66, %p67
    %s69 = ssub.s32 %s9, %s16
    %p70 = scmp.eq.s32.totalorder %s69, 0
    %s72 = sadd.s32 %s71, 1
    %s73 = scalar_select %p70, %s71, %s72
    %p76 = pneg %p70
    %p77 = scmp.eq.s32.totalorder %s9, 1
    %p78 = por %p76, %p77
    %p79 = scmp.ne.s32.totalorder %s71, %s74
    %p80 = scmp.eq.s32.totalorder %s9, 0
    %p81 = por %p79, %p80
    %p82 = scmp.ne.s32.totalorder %s71, %s74
    %p83 = scmp.eq.s32.totalorder %s14, 1
    %p84 = por %p82, %p83
    %p85 = scmp.ne.s32.totalorder %s74, %s75
    %p86 = scmp.eq.s32.totalorder %s14, 0
    %p87 = por %p85, %p86
    %p88 = scmp.ne.s32.totalorder %s74, %s75
    %p89 = scmp.eq.s32.totalorder %s15, 1
    %p90 = por %p88, %p89
    %p92 = scmp.ne.s32.totalorder %s75, %s91
    %p93 = scmp.eq.s32.totalorder %s15, 0
    %p94 = por %p92, %p93
    %s95 = ssub.s32 %s9, %s16
    %p96 = scmp.eq.s32.totalorder %s95, 0
    %s98 = sadd.s32 %s97, 1
    %s99 = scalar_select %p96, %s97, %s98
    %p102 = pneg %p96
    %p103 = scmp.eq.s32.totalorder %s9, 1
    %p104 = por %p102, %p103
    %p105 = scmp.ne.s32.totalorder %s97, %s100
    %p106 = scmp.eq.s32.totalorder %s9, 0
    %p107 = por %p105, %p106
    %p108 = scmp.ne.s32.totalorder %s97, %s100
    %p109 = scmp.eq.s32.totalorder %s14, 1
    %p110 = por %p108, %p109
    %p111 = scmp.ne.s32.totalorder %s100, %s101
    %p112 = scmp.eq.s32.totalorder %s14, 0
    %p113 = por %p111, %p112
    %p114 = scmp.ne.s32.totalorder %s100, %s101
    %p115 = scmp.eq.s32.totalorder %s15, 1
    %p116 = por %p114, %p115
    %p118 = scmp.ne.s32.totalorder %s101, %s117
    %p119 = scmp.eq.s32.totalorder %s15, 0
    %p120 = por %p118, %p119
    %p121 = scmp.le.s32.totalorder 1, %s9
    %p122 = scmp.lt.s32.totalorder %s9, 3
    %p123 = pnand %p121, %p122
    %p124 = pneg %p123
    // Predicated region
    $region9: #{pmpa3_ave_forward.3} parent=5 // pred_check
      _
    $region10: #{pmpa3_ave_forward.3} parent=5 // pred_check_branch
      %126 = sbr.rel (%p123) target = $region12
    $region11: #{pmpa3_ave_forward.3} parent=5 // pred_region
      %s127 = ssub.s32 %s9, 1
    $region12: #{pmpa3_ave_forward.3} parent=5 // pred_fallthru
      _
    %p128 = scmp.lt.s32.totalorder %s9, 2
    // Predicated region
    $region13: #{pmpa3_ave_forward.3} parent=5 // pred_check
      %p129 = pneg %p128
    $region14: #{pmpa3_ave_forward.3} parent=5 // pred_check_branch
      %131 = sbr.rel (%p129) target = $region16
    $region15: #{pmpa3_ave_forward.3} parent=5 // pred_region
      // Predicated region
      $region17: #{pmpa3_ave_forward.3} parent=15 // pred_check
        %p132 = pneg %p29
      $region18: #{pmpa3_ave_forward.3} parent=15 // pred_check_branch
        %134 = sbr.rel (%p132) target = $region20
      $region19: #{pmpa3_ave_forward.3} parent=15 // pred_region
        %p135 = scmp.lt.s32.totalorder %s9, 1
        %s136 = scalar_select %p135, %s9, 1
        %s137 = smul.addr %s136, 2
        %s138 = smul.addr %s137, 8
        %s139 = scalar_lea.vmem %s0, %s138
      $region20: #{pmpa3_ave_forward.3} parent=15 // pred_fallthru
        _
      // Predicated region
      $region21: #{pmpa3_ave_forward.3} parent=15 // pred_check
        %p140 = pneg %p55
      $region22: #{pmpa3_ave_forward.3} parent=15 // pred_check_branch
        %142 = sbr.rel (%p140) target = $region24
      $region23: #{pmpa3_ave_forward.3} parent=15 // pred_region
        %p143 = scmp.lt.s32.totalorder %s9, 1
        %s144 = scalar_select %p143, %s9, 1
        %s145 = smul.addr %s144, 2
        %s146 = smul.addr %s145, 8
        %s147 = scalar_lea.vmem %s1, %s146
      $region24: #{pmpa3_ave_forward.3} parent=15 // pred_fallthru
        _
      // Predicated region
      $region25: #{pmpa3_ave_forward.3} parent=15 // pred_check
        %p148 = pneg %p81
      $region26: #{pmpa3_ave_forward.3} parent=15 // pred_check_branch
        %150 = sbr.rel (%p148) target = $region28
      $region27: #{pmpa3_ave_forward.3} parent=15 // pred_region
        %p151 = scmp.lt.s32.totalorder %s9, 1
        %s152 = scalar_select %p151, %s9, 1
        %s153 = smul.addr %s152, 2
        %s154 = smul.addr %s153, 8
        %s155 = scalar_lea.vmem %s2, %s154
      $region28: #{pmpa3_ave_forward.3} parent=15 // pred_fallthru
        _
    $region16: #{pmpa3_ave_forward.3} parent=5 // pred_fallthru
      _
    %p156 = scmp.le.s32.totalorder 1, %s9
    %p157 = scmp.lt.s32.totalorder %s9, 3
    %p158 = pnand %p156, %p157
    %p159 = pneg %p158
    // Predicated region
    $region29: #{pmpa3_ave_forward.3} parent=5 // pred_check
      _
    $region30: #{pmpa3_ave_forward.3} parent=5 // pred_check_branch
      %161 = sbr.rel (%p158) target = $region32
    $region31: #{pmpa3_ave_forward.3} parent=5 // pred_region
      %s162 = ssub.s32 %s9, 1
      %p163 = scmp.lt.s32.totalorder %s14, 1
      %s164 = scalar_select %p163, %s14, 1
      %s165 = smul.addr %s164, 2
      %s166 = smul.addr %s165, 8
      %s167 = scalar_lea.vmem %s0, %s166
      %p168 = pneg %p35
      %p169 = pneg %p32
      %p170 = scmp.lt.s32.totalorder %s14, 1
      %s171 = scalar_select %p170, %s14, 1
      %s172 = smul.addr %s171, 2
      %s173 = smul.addr %s172, 8
      %s174 = scalar_lea.vmem %s1, %s173
      %p175 = pneg %p61
      %p176 = pneg %p58
      %p177 = scmp.lt.s32.totalorder %s14, 1
      %s178 = scalar_select %p177, %s14, 1
      %s179 = smul.addr %s178, 2
      %s180 = smul.addr %s179, 8
      %s181 = scalar_lea.vmem %s2, %s180
      %p182 = pneg %p87
      %p183 = pneg %p84
      %p184 = pneg %p113
      %p185 = pneg %p110
      %p186 = scmp.lt.s32.totalorder %s14, 1
      %s187 = scalar_select %p186, %s14, 1
      %s188 = smul.addr %s187, 2
      %s189 = smul.addr %s188, 8
      %s190 = scalar_lea.vmem %s3, %s189
      %p191 = scmp.lt.s32.totalorder %s14, 1
      %s192 = scalar_select %p191, %s14, 1
      %s193 = smul.addr %s192, 2
      %s194 = smul.addr %s193, 8
      %s195 = scalar_lea.vmem %s0, %s194
      %p196 = scmp.lt.s32.totalorder %s14, 1
      %s197 = scalar_select %p196, %s14, 1
      %s198 = smul.addr %s197, 2
      %s199 = smul.addr %s198, 8
      %s200 = scalar_lea.vmem %s1, %s199
      %p201 = scmp.lt.s32.totalorder %s14, 1
      %s202 = scalar_select %p201, %s14, 1
      %s203 = smul.addr %s202, 2
      %s204 = smul.addr %s203, 8
      %s205 = scalar_lea.vmem %s2, %s204
      %p206 = scmp.lt.s32.totalorder %s14, 1
      %s207 = scalar_select %p206, %s14, 1
      %s208 = smul.addr %s207, 2
      %s209 = smul.addr %s208, 8
      %s210 = scalar_lea.vmem %s3, %s209
      %v211 = vld [vmem:[%s195] sm:$0xff]
      %v212 = vld [vmem:[%s195 + $0x8] sm:$0xff]
      %v213 = vld [vmem:[%s200] sm:$0xff]
      %v214 = vld [vmem:[%s200 + $0x8] sm:$0xff]
      %v215 = vld [vmem:[%s205] sm:$0xff]
      %v216 = vld [vmem:[%s205 + $0x8] sm:$0xff]
      %vm217 = vcmask 523264
      %v219 = vsel %vm217, %v211, 0
      %v222 = vsel %vm217, %v212, 0
      %v225 = vsel %vm217, %v213, 0
      %v228 = vsel %vm217, %v214, 0
      %230 = vmatpush.xpose.msra.mxu0 0.0
      %231 = vmatpush.xpose.msra.mxu0 0.0
      %232 = vmatpush.xpose.msra.mxu0 0.0
      %233 = vmatpush.xpose.msra.mxu0 0.0
      %234 = vmatpush.xpose.msra.mxu0 0.0
      %235 = vmatpush.xpose.msra.mxu0 0.0
      %236 = vmatpush.xpose.msra.mxu0 0.0
      %237 = vmatpush.xpose.msra.mxu0 0.0
      %238 = vmatpush.xpose.msra.mxu0 0.0
      %239 = vmatpush.xpose.msra.mxu0 0.0
      %240 = vmatpush.xpose.msra.mxu0 0.0
      %241 = vmatpush.xpose.msra.mxu0 0.0
      %242 = vmatpush.xpose.msra.mxu0 0.0
      %243 = vmatpush.xpose.msra.mxu0 0.0
      %244 = vmatpush.xpose.msra.mxu0 %v228
      %245 = vmatpush.xpose.msra.mxu0 %v225
      %246 = vmatmul.f32.gmra.mxu0 %v219
      %v247 = vpop.f32.mrf.mxu0
      %v248 = vadd.f32 0.0, %v247
      %249 = vmatmul.f32.gmra.mxu0 %v222
      %v250 = vpop.f32.mrf.mxu0
      %v251 = vadd.f32 0.0, %v250
      %252 = vdwg.mxu0
      %vm253 = vcmask 130048
      %v254 = vsel %vm253, %v248, -inf
      %255 = vmax.xlane.f32.xlu0 %v254
      %v256 = vpop.xlane.xlu0 %255
      %v257 = vsel %vm253, %v251, -inf
      %258 = vmax.xlane.f32.xlu0 %v257
      %v259 = vpop.xlane.xlu0 %258
      %v260 = vsub.f32 %v248, %v256
      %v261 = vsub.f32 %v251, %v259
      %v262 = vmul.f32 %v260, 1.442695
      %v263 = vpow.pop %v262
      %v264 = vmul.f32 %v261, 1.442695
      %v265 = vpow.pop %v264
      %v266 = vsel %vm253, %v263, 0.0
      %267 = vadd.xlane.f32.xlu0 %v266
      %v268 = vpop.xlane.xlu0 %267
      %v269 = vsel %vm253, %v265, 0.0
      %270 = vadd.xlane.f32.xlu0 %v269
      %v271 = vpop.xlane.xlu0 %270
      %v272 = vrcp.pop %v268
      %v273 = vrcp.pop %v271
      %v274 = vmul.f32 %v263, %v272
      %v275 = vmul.f32 %v265, %v273
      %v277 = vsel %vm253, %v274, 0
      %v280 = vsel %vm253, %v275, 0
      %282 = vmatpush.msra.mxu0 0.0
      %283 = vmatpush.msra.mxu0 0.0
      %284 = vmatpush.msra.mxu0 0.0
      %285 = vmatpush.msra.mxu0 0.0
      %286 = vmatpush.msra.mxu0 0.0
      %287 = vmatpush.msra.mxu0 0.0
      %288 = vmatpush.msra.mxu0 0.0
      %289 = vmatpush.msra.mxu0 0.0
      %290 = vmatpush.msra.mxu0 0.0
      %291 = vmatpush.msra.mxu0 0.0
      %292 = vmatpush.msra.mxu0 0.0
      %293 = vmatpush.msra.mxu0 0.0
      %294 = vmatpush.msra.mxu0 0.0
      %295 = vmatpush.msra.mxu0 0.0
      %296 = vmatpush.msra.mxu0 %v216
      %297 = vmatpush.msra.mxu0 %v215
      %298 = vmatmul.f32.gmra.mxu0 %v277
      %v299 = vpop.f32.mrf.mxu0
      %v300 = vadd.f32 %v215, %v299
      %301 = vmatmul.f32.gmra.mxu0 %v280
      %v302 = vpop.f32.mrf.mxu0
      %v303 = vadd.f32 %v216, %v302
      %304 = vdwg.mxu0
      %305 = vst.msk [vmem:[%s210] sm:$0xff] %vm217, %v300
      %306 = vst.msk [vmem:[%s210 + $0x8] sm:$0xff] %vm217, %v303
      %p307 = scmp.lt.s32.totalorder %s14, 1
      %s308 = scalar_select %p307, %s14, 1
      %s309 = smul.addr %s308, 2
      %s310 = smul.addr %s309, 8
      %s311 = scalar_lea.vmem %s3, %s310
      // Predicated region
      $region33: #{pmpa3_ave_forward.3} parent=31 // pred_check
        %p312 = pneg %p110
      $region34: #{pmpa3_ave_forward.3} parent=31 // pred_check_branch
        %314 = sbr.rel (%p312) target = $region36
      $region35: #{pmpa3_ave_forward.3} parent=31 // pred_region
        _
      $region36: #{pmpa3_ave_forward.3} parent=31 // pred_fallthru
        _
    $region32: #{pmpa3_ave_forward.3} parent=5 // pred_fallthru
      _
    %p315 = scmp.le.s32.totalorder 2, %s9
    // Predicated region
    $region37: #{pmpa3_ave_forward.3} parent=5 // pred_check
      %p316 = pneg %p315
    $region38: #{pmpa3_ave_forward.3} parent=5 // pred_check_branch
      %318 = sbr.rel (%p316) target = $region40
    $region39: #{pmpa3_ave_forward.3} parent=5 // pred_region
      %s319 = ssub.s32 %s9, 2
      // Predicated region
      $region41: #{pmpa3_ave_forward.3} parent=39 // pred_check
        %p320 = pneg %p116
      $region42: #{pmpa3_ave_forward.3} parent=39 // pred_check_branch
        %322 = sbr.rel (%p320) target = $region44
      $region43: #{pmpa3_ave_forward.3} parent=39 // pred_region
        %p323 = scmp.lt.s32.totalorder %s15, 1
        %s324 = scalar_select %p323, %s15, 1
        %s325 = smul.addr %s324, 2
        %s326 = smul.addr %s325, 8
        %s327 = scalar_lea.vmem %s3, %s326
      $region44: #{pmpa3_ave_forward.3} parent=39 // pred_fallthru
        _
    $region40: #{pmpa3_ave_forward.3} parent=5 // pred_fallthru
      _
  $region6: #{pmpa3_ave_forward.3} parent=0 // loop_footer
    %s13 = sadd.s32 1, %s9
  $region7: #{pmpa3_ave_forward.3} parent=0 // loop_footer_branch
    %8 = sbr.rel target = $region3
  $region8: #{pmpa3_ave_forward.3} parent=0 // loop_exit
    _

// kernel: pmpa3_ave_forward.2
$region0: #{pmpa3_ave_forward.2}
  #allocation0 [shape = 'u32[]', space=smem, size = 0x4, offset = 0x4, fixed_abs, tag = 'smem constant byte address 0x4 - core index']
  #allocation1 [shape = 'u32[72,128]{1,0:T(1,128)}', space=vmem, size = 0x9000, scoped, tag = 'internal scratch']
  %s0 = inlined_call_operand.vmem [shape: f32[2,4,512], index: 0, kind: input, shape index: {}]
  %s1 = inlined_call_operand.vmem [shape: f32[4,9], index: 1, kind: input, shape index: {}]
  %s2 = inlined_call_operand.vmem [shape: f32[4,9], index: 2, kind: input, shape index: {}]
  %s3 = inlined_call_operand.vmem [shape: f32[4,1], index: 3, kind: input, shape index: {}]
  %s4 = inlined_call_operand.vmem [shape: f32[4,1], index: 4, kind: input, shape index: {}]
  %s5 = inlined_call_operand.vmem [shape: f32[4,4], index: 5, kind: input, shape index: {}]
  %s6 = inlined_call_operand.vmem [shape: f32[2,4,384], index: 6, kind: output, shape index: {0}]
  %s7 = inlined_call_operand.vmem [shape: f32[2,4,384], index: 7, kind: output, shape index: {1}]
  %s8 = inlined_call_operand.vmem [shape: f32[2,4,384], index: 8, kind: output, shape index: {2}]
  %9 = xla_tuple %s6, %s7, %s8
  %s10 = sld [smem:[#allocation0]]
  $region73: #{pmpa3_ave_forward.2} parent=0
    _
  %s12 = ssub.s32 1, %s10
  %s13 = scalar_select 0, %s12, %s10
  loop: start=0, step=1, limit=4
  $region2: #{pmpa3_ave_forward.2} parent=0 // loop_pre_header
    _
  $region3: #{pmpa3_ave_forward.2} parent=0 // loop_header
    %s15 = sphi 0, %s19
    %p16 = scmp.ge.s32.totalorder %s15, 4
    %s25 = sphi 0, %s27
    %s28 = sphi 0, %s25
    %s29 = sphi 0, %s28
    %s45 = sphi 0, %s29
    %s49 = sphi 0, %s49
    %s51 = sphi 0, %s49
    %s52 = sphi 0, %s51
    %s66 = sphi 0, %s52
    %s70 = sphi 0, %s70
    %s72 = sphi 0, %s70
    %s73 = sphi 0, %s72
    %s87 = sphi 0, %s73
    %s91 = sphi 0, %s91
    %s93 = sphi 0, %s91
    %s94 = sphi 0, %s93
    %s108 = sphi 0, %s94
    %s112 = sphi 0, %s112
    %s114 = sphi 0, %s112
    %s115 = sphi 0, %s114
    %s129 = sphi 0, %s115
    %s133 = sphi 0, %s133
    %s135 = sphi 0, %s133
    %s136 = sphi 0, %s135
    %s150 = sphi 0, %s136
    %s156 = sphi 0, %s158
    %s159 = sphi 0, %s156
    %s160 = sphi 0, %s159
    %s176 = sphi 0, %s160
    %s182 = sphi 0, %s184
    %s185 = sphi 0, %s182
    %s186 = sphi 0, %s185
    %s202 = sphi 0, %s186
    %s208 = sphi 0, %s210
    %s211 = sphi 0, %s208
    %s212 = sphi 0, %s211
    %s228 = sphi 0, %s212
  $region4: #{pmpa3_ave_forward.2} parent=0 // loop_header_branch
    %18 = sbr.rel (%p16) target = $region8
  $region5: #{pmpa3_ave_forward.2} parent=0 // loop_body
    %s20 = ssub.s32 %s15, 1
    %s21 = ssub.s32 %s15, 2
    %s22 = sadd.s32 %s15, 1
    %s23 = ssub.s32 %s15, %s22
    %p24 = scmp.eq.s32.totalorder %s23, 0
    %s26 = sadd.s32 %s25, 1
    %s27 = scalar_select %p24, %s25, %s26
    %p30 = pneg %p24
    %p31 = scmp.eq.s32.totalorder %s15, 1
    %p32 = por %p30, %p31
    %p33 = scmp.ne.s32.totalorder %s25, %s28
    %p34 = scmp.eq.s32.totalorder %s15, 0
    %p35 = por %p33, %p34
    %p36 = scmp.ne.s32.totalorder %s25, %s28
    %p37 = scmp.eq.s32.totalorder %s20, 1
    %p38 = por %p36, %p37
    %p39 = scmp.ne.s32.totalorder %s28, %s29
    %p40 = scmp.eq.s32.totalorder %s20, 0
    %p41 = por %p39, %p40
    %p42 = scmp.ne.s32.totalorder %s28, %s29
    %p43 = scmp.eq.s32.totalorder %s21, 1
    %p44 = por %p42, %p43
    %p46 = scmp.ne.s32.totalorder %s29, %s45
    %p47 = scmp.eq.s32.totalorder %s21, 0
    %p48 = por %p46, %p47
    %s50 = sadd.s32 %s49, 1
    %p53 = scmp.eq.s32.totalorder %s15, 1
    %p54 = scmp.ne.s32.totalorder %s49, %s51
    %p55 = scmp.eq.s32.totalorder %s15, 0
    %p56 = por %p54, %p55
    %p57 = scmp.ne.s32.totalorder %s49, %s51
    %p58 = scmp.eq.s32.totalorder %s20, 1
    %p59 = por %p57, %p58
    %p60 = scmp.ne.s32.totalorder %s51, %s52
    %p61 = scmp.eq.s32.totalorder %s20, 0
    %p62 = por %p60, %p61
    %p63 = scmp.ne.s32.totalorder %s51, %s52
    %p64 = scmp.eq.s32.totalorder %s21, 1
    %p65 = por %p63, %p64
    %p67 = scmp.ne.s32.totalorder %s52, %s66
    %p68 = scmp.eq.s32.totalorder %s21, 0
    %p69 = por %p67, %p68
    %s71 = sadd.s32 %s70, 1
    %p74 = scmp.eq.s32.totalorder %s15, 1
    %p75 = scmp.ne.s32.totalorder %s70, %s72
    %p76 = scmp.eq.s32.totalorder %s15, 0
    %p77 = por %p75, %p76
    %p78 = scmp.ne.s32.totalorder %s70, %s72
    %p79 = scmp.eq.s32.totalorder %s20, 1
    %p80 = por %p78, %p79
    %p81 = scmp.ne.s32.totalorder %s72, %s73
    %p82 = scmp.eq.s32.totalorder %s20, 0
    %p83 = por %p81, %p82
    %p84 = scmp.ne.s32.totalorder %s72, %s73
    %p85 = scmp.eq.s32.totalorder %s21, 1
    %p86 = por %p84, %p85
    %p88 = scmp.ne.s32.totalorder %s73, %s87
    %p89 = scmp.eq.s32.totalorder %s21, 0
    %p90 = por %p88, %p89
    %s92 = sadd.s32 %s91, 1
    %p95 = scmp.eq.s32.totalorder %s15, 1
    %p96 = scmp.ne.s32.totalorder %s91, %s93
    %p97 = scmp.eq.s32.totalorder %s15, 0
    %p98 = por %p96, %p97
    %p99 = scmp.ne.s32.totalorder %s91, %s93
    %p100 = scmp.eq.s32.totalorder %s20, 1
    %p101 = por %p99, %p100
    %p102 = scmp.ne.s32.totalorder %s93, %s94
    %p103 = scmp.eq.s32.totalorder %s20, 0
    %p104 = por %p102, %p103
    %p105 = scmp.ne.s32.totalorder %s93, %s94
    %p106 = scmp.eq.s32.totalorder %s21, 1
    %p107 = por %p105, %p106
    %p109 = scmp.ne.s32.totalorder %s94, %s108
    %p110 = scmp.eq.s32.totalorder %s21, 0
    %p111 = por %p109, %p110
    %s113 = sadd.s32 %s112, 1
    %p116 = scmp.eq.s32.totalorder %s15, 1
    %p117 = scmp.ne.s32.totalorder %s112, %s114
    %p118 = scmp.eq.s32.totalorder %s15, 0
    %p119 = por %p117, %p118
    %p120 = scmp.ne.s32.totalorder %s112, %s114
    %p121 = scmp.eq.s32.totalorder %s20, 1
    %p122 = por %p120, %p121
    %p123 = scmp.ne.s32.totalorder %s114, %s115
    %p124 = scmp.eq.s32.totalorder %s20, 0
    %p125 = por %p123, %p124
    %p126 = scmp.ne.s32.totalorder %s114, %s115
    %p127 = scmp.eq.s32.totalorder %s21, 1
    %p128 = por %p126, %p127
    %p130 = scmp.ne.s32.totalorder %s115, %s129
    %p131 = scmp.eq.s32.totalorder %s21, 0
    %p132 = por %p130, %p131
    %s134 = sadd.s32 %s133, 1
    %p137 = scmp.eq.s32.totalorder %s15, 1
    %p138 = scmp.ne.s32.totalorder %s133, %s135
    %p139 = scmp.eq.s32.totalorder %s15, 0
    %p140 = por %p138, %p139
    %p141 = scmp.ne.s32.totalorder %s133, %s135
    %p142 = scmp.eq.s32.totalorder %s20, 1
    %p143 = por %p141, %p142
    %p144 = scmp.ne.s32.totalorder %s135, %s136
    %p145 = scmp.eq.s32.totalorder %s20, 0
    %p146 = por %p144, %p145
    %p147 = scmp.ne.s32.totalorder %s135, %s136
    %p148 = scmp.eq.s32.totalorder %s21, 1
    %p149 = por %p147, %p148
    %p151 = scmp.ne.s32.totalorder %s136, %s150
    %p152 = scmp.eq.s32.totalorder %s21, 0
    %p153 = por %p151, %p152
    %s154 = ssub.s32 %s15, %s22
    %p155 = scmp.eq.s32.totalorder %s154, 0
    %s157 = sadd.s32 %s156, 1
    %s158 = scalar_select %p155, %s156, %s157
    %p161 = pneg %p155
    %p162 = scmp.eq.s32.totalorder %s15, 1
    %p163 = por %p161, %p162
    %p164 = scmp.ne.s32.totalorder %s156, %s159
    %p165 = scmp.eq.s32.totalorder %s15, 0
    %p166 = por %p164, %p165
    %p167 = scmp.ne.s32.totalorder %s156, %s159
    %p168 = scmp.eq.s32.totalorder %s20, 1
    %p169 = por %p167, %p168
    %p170 = scmp.ne.s32.totalorder %s159, %s160
    %p171 = scmp.eq.s32.totalorder %s20, 0
    %p172 = por %p170, %p171
    %p173 = scmp.ne.s32.totalorder %s159, %s160
    %p174 = scmp.eq.s32.totalorder %s21, 1
    %p175 = por %p173, %p174
    %p177 = scmp.ne.s32.totalorder %s160, %s176
    %p178 = scmp.eq.s32.totalorder %s21, 0
    %p179 = por %p177, %p178
    %s180 = ssub.s32 %s15, %s22
    %p181 = scmp.eq.s32.totalorder %s180, 0
    %s183 = sadd.s32 %s182, 1
    %s184 = scalar_select %p181, %s182, %s183
    %p187 = pneg %p181
    %p188 = scmp.eq.s32.totalorder %s15, 1
    %p189 = por %p187, %p188
    %p190 = scmp.ne.s32.totalorder %s182, %s185
    %p191 = scmp.eq.s32.totalorder %s15, 0
    %p192 = por %p190, %p191
    %p193 = scmp.ne.s32.totalorder %s182, %s185
    %p194 = scmp.eq.s32.totalorder %s20, 1
    %p195 = por %p193, %p194
    %p196 = scmp.ne.s32.totalorder %s185, %s186
    %p197 = scmp.eq.s32.totalorder %s20, 0
    %p198 = por %p196, %p197
    %p199 = scmp.ne.s32.totalorder %s185, %s186
    %p200 = scmp.eq.s32.totalorder %s21, 1
    %p201 = por %p199, %p200
    %p203 = scmp.ne.s32.totalorder %s186, %s202
    %p204 = scmp.eq.s32.totalorder %s21, 0
    %p205 = por %p203, %p204
    %s206 = ssub.s32 %s15, %s22
    %p207 = scmp.eq.s32.totalorder %s206, 0
    %s209 = sadd.s32 %s208, 1
    %s210 = scalar_select %p207, %s208, %s209
    %p213 = pneg %p207
    %p214 = scmp.eq.s32.totalorder %s15, 1
    %p215 = por %p213, %p214
    %p216 = scmp.ne.s32.totalorder %s208, %s211
    %p217 = scmp.eq.s32.totalorder %s15, 0
    %p218 = por %p216, %p217
    %p219 = scmp.ne.s32.totalorder %s208, %s211
    %p220 = scmp.eq.s32.totalorder %s20, 1
    %p221 = por %p219, %p220
    %p222 = scmp.ne.s32.totalorder %s211, %s212
    %p223 = scmp.eq.s32.totalorder %s20, 0
    %p224 = por %p222, %p223
    %p225 = scmp.ne.s32.totalorder %s211, %s212
    %p226 = scmp.eq.s32.totalorder %s21, 1
    %p227 = por %p225, %p226
    %p229 = scmp.ne.s32.totalorder %s212, %s228
    %p230 = scmp.eq.s32.totalorder %s21, 0
    %p231 = por %p229, %p230
    %p232 = scmp.le.s32.totalorder 1, %s15
    %p233 = scmp.lt.s32.totalorder %s15, 3
    %p234 = pnand %p232, %p233
    %p235 = pneg %p234
    // Predicated region
    $region9: #{pmpa3_ave_forward.2} parent=5 // pred_check
      _
    $region10: #{pmpa3_ave_forward.2} parent=5 // pred_check_branch
      %237 = sbr.rel (%p234) target = $region12
    $region11: #{pmpa3_ave_forward.2} parent=5 // pred_region
      %s238 = ssub.s32 %s15, 1
      // Predicated region
      $region13: #{pmpa3_ave_forward.2} parent=11 // pred_check
        %p239 = pneg %p62
      $region14: #{pmpa3_ave_forward.2} parent=11 // pred_check_branch
        %241 = sbr.rel (%p239) target = $region16
      $region15: #{pmpa3_ave_forward.2} parent=11 // pred_region
        _
      $region16: #{pmpa3_ave_forward.2} parent=11 // pred_fallthru
        _
      // Predicated region
      $region17: #{pmpa3_ave_forward.2} parent=11 // pred_check
        %p242 = pneg %p83
      $region18: #{pmpa3_ave_forward.2} parent=11 // pred_check_branch
        %244 = sbr.rel (%p242) target = $region20
      $region19: #{pmpa3_ave_forward.2} parent=11 // pred_region
        _
      $region20: #{pmpa3_ave_forward.2} parent=11 // pred_fallthru
        _
      // Predicated region
      $region21: #{pmpa3_ave_forward.2} parent=11 // pred_check
        %p245 = pneg %p104
      $region22: #{pmpa3_ave_forward.2} parent=11 // pred_check_branch
        %247 = sbr.rel (%p245) target = $region24
      $region23: #{pmpa3_ave_forward.2} parent=11 // pred_region
        _
      $region24: #{pmpa3_ave_forward.2} parent=11 // pred_fallthru
        _
      // Predicated region
      $region25: #{pmpa3_ave_forward.2} parent=11 // pred_check
        %p248 = pneg %p125
      $region26: #{pmpa3_ave_forward.2} parent=11 // pred_check_branch
        %250 = sbr.rel (%p248) target = $region28
      $region27: #{pmpa3_ave_forward.2} parent=11 // pred_region
        _
      $region28: #{pmpa3_ave_forward.2} parent=11 // pred_fallthru
        _
      // Predicated region
      $region29: #{pmpa3_ave_forward.2} parent=11 // pred_check
        %p251 = pneg %p146
      $region30: #{pmpa3_ave_forward.2} parent=11 // pred_check_branch
        %253 = sbr.rel (%p251) target = $region32
      $region31: #{pmpa3_ave_forward.2} parent=11 // pred_region
        _
      $region32: #{pmpa3_ave_forward.2} parent=11 // pred_fallthru
        _
    $region12: #{pmpa3_ave_forward.2} parent=5 // pred_fallthru
      _
    %p254 = scmp.lt.s32.totalorder %s15, 2
    // Predicated region
    $region33: #{pmpa3_ave_forward.2} parent=5 // pred_check
      %p255 = pneg %p254
    $region34: #{pmpa3_ave_forward.2} parent=5 // pred_check_branch
      %257 = sbr.rel (%p255) target = $region36
    $region35: #{pmpa3_ave_forward.2} parent=5 // pred_region
      // Predicated region
      $region37: #{pmpa3_ave_forward.2} parent=35 // pred_check
        %p258 = pneg %p35
      $region38: #{pmpa3_ave_forward.2} parent=35 // pred_check_branch
        %260 = sbr.rel (%p258) target = $region40
      $region39: #{pmpa3_ave_forward.2} parent=35 // pred_region
        %p261 = scmp.lt.s32.totalorder %s15, 1
        %s262 = scalar_select %p261, %s15, 1
        %s263 = smul.addr %s262, 4
        %s264 = smul.addr %s263, 4
        %s265 = scalar_lea.vmem %s0, %s264
      $region40: #{pmpa3_ave_forward.2} parent=35 // pred_fallthru
        _
    $region36: #{pmpa3_ave_forward.2} parent=5 // pred_fallthru
      _
    %p266 = scmp.le.s32.totalorder 1, %s15
    %p267 = scmp.lt.s32.totalorder %s15, 3
    %p268 = pnand %p266, %p267
    %p269 = pneg %p268
    // Predicated region
    $region41: #{pmpa3_ave_forward.2} parent=5 // pred_check
      _
    $region42: #{pmpa3_ave_forward.2} parent=5 // pred_check_branch
      %271 = sbr.rel (%p268) target = $region44
    $region43: #{pmpa3_ave_forward.2} parent=5 // pred_region
      %s272 = ssub.s32 %s15, 1
      %p273 = scmp.lt.s32.totalorder %s20, 1
      %s274 = scalar_select %p273, %s20, 1
      %s275 = smul.addr %s274, 4
      %s276 = smul.addr %s275, 4
      %s277 = scalar_lea.vmem %s0, %s276
      %p278 = pneg %p41
      %p279 = pneg %p38
      %p280 = pneg %p62
      %p281 = pneg %p59
      %p282 = pneg %p83
      %p283 = pneg %p80
      %p284 = pneg %p104
      %p285 = pneg %p101
      %p286 = pneg %p125
      %p287 = pneg %p122
      %p288 = pneg %p146
      %p289 = pneg %p143
      %p290 = pneg %p172
      %p291 = pneg %p169
      %p292 = scmp.lt.s32.totalorder %s20, 1
      %s293 = scalar_select %p292, %s20, 1
      %s294 = smul.addr %s293, 3
      %s295 = smul.addr %s294, 4
      %s296 = scalar_lea.vmem %s6, %s295
      %p297 = pneg %p198
      %p298 = pneg %p195
      %p299 = scmp.lt.s32.totalorder %s20, 1
      %s300 = scalar_select %p299, %s20, 1
      %s301 = smul.addr %s300, 3
      %s302 = smul.addr %s301, 4
      %s303 = scalar_lea.vmem %s7, %s302
      %p304 = pneg %p224
      %p305 = pneg %p221
      %p306 = scmp.lt.s32.totalorder %s20, 1
      %s307 = scalar_select %p306, %s20, 1
      %s308 = smul.addr %s307, 3
      %s309 = smul.addr %s308, 4
      %s310 = scalar_lea.vmem %s8, %s309
      %p311 = scmp.lt.s32.totalorder %s20, 1
      %s312 = scalar_select %p311, %s20, 1
      %s313 = smul.addr %s312, 4
      %s314 = smul.addr %s313, 4
      %s315 = scalar_lea.vmem %s0, %s314
      %p316 = scmp.lt.s32.totalorder %s20, 1
      %s317 = scalar_select %p316, %s20, 1
      %s318 = smul.addr %s317, 3
      %s319 = smul.addr %s318, 4
      %s320 = scalar_lea.vmem %s6, %s319
      %p321 = scmp.lt.s32.totalorder %s20, 1
      %s322 = scalar_select %p321, %s20, 1
      %s323 = smul.addr %s322, 3
      %s324 = smul.addr %s323, 4
      %s325 = scalar_lea.vmem %s7, %s324
      %p326 = scmp.lt.s32.totalorder %s20, 1
      %s327 = scalar_select %p326, %s20, 1
      %s328 = smul.addr %s327, 3
      %s329 = smul.addr %s328, 4
      %s330 = scalar_lea.vmem %s8, %s329
      %v331 = vld [vmem:[%s3] sm:$0xf]
      %333 = vset.pattern.permute.xlu0 0
      %334 = vperm.xlu0 %333, %v331
      %v335 = vpop.permute.xlu0 %334
      %v337 = vld [vmem:[%s4] sm:$0xf]
      %339 = vset.pattern.permute.xlu0 0
      %340 = vperm.xlu0 %339, %v337
      %v341 = vpop.permute.xlu0 %340
      %v343 = vld [vmem:[%s315] sm:$0xff]
      %v344 = vld [vmem:[%s315 + $0x8] sm:$0xf]
      %v345 = vld [vmem:[%s1] sm:$0xf]
      %347 = vset.pattern.permute.xlu0 0
      %348 = vperm.xlu0 %347, %v345
      %v349 = vpop.permute.xlu0 %348
      %v351 = vunpack.c.l.s4 839922192
      %v352 = vunpack.c.0.s8 %v351
      %v353 = vperm.slane %v349, %v352
      %v355 = vmul.f32 %v343, %v353
      %v356 = vmul.f32 %v344, %v353
      %359 = vst [vmem:[#allocation1] ss:$2 sm:$0xff] %v355
      %s360 = scalar_lea.vmem [#allocation1], 16
      %361 = vst [vmem:[%s360] ss:$2 sm:$0xff] %v356
      %v362 = vld.sshfl [vmem:[#allocation1] sm:$0xff pattern:$0x75316420]
      %v363 = vld.sshfl [vmem:[#allocation1 + $0x8] sm:$0xff pattern:$0x75316420]
      %v364 = vld.sshfl [vmem:[#allocation1 + $0x10] sm:$0xff pattern:$0x75316420]
      %v368 = vadd.f32 %v335, %v362
      %v369 = vadd.f32 %v335, %v363
      %v370 = vadd.f32 %v335, %v364
      %v371 = vld [vmem:[%s2] sm:$0xf]
      %373 = vset.pattern.permute.xlu0 0
      %374 = vperm.xlu0 %373, %v371
      %v375 = vpop.permute.xlu0 %374
      %v377 = vunpack.c.l.s4 839922192
      %v378 = vunpack.c.0.s8 %v377
      %v379 = vperm.slane %v375, %v378
      %v381 = vmul.f32 %v343, %v379
      %v382 = vmul.f32 %v344, %v379
      %385 = vst [vmem:[#allocation1] ss:$2 sm:$0xff] %v381
      %s386 = scalar_lea.vmem [#allocation1], 16
      %387 = vst [vmem:[%s386] ss:$2 sm:$0xff] %v382
      %v388 = vld.sshfl [vmem:[#allocation1] sm:$0xff pattern:$0x75316420]
      %v389 = vld.sshfl [vmem:[#allocation1 + $0x8] sm:$0xff pattern:$0x75316420]
      %v390 = vld.sshfl [vmem:[#allocation1 + $0x10] sm:$0xff pattern:$0x75316420]
      %v394 = vadd.f32 %v341, %v388
      %v395 = vadd.f32 %v341, %v389
      %v396 = vadd.f32 %v341, %v390
      %v397 = vld [vmem:[%s315] sm:$0xff]
      %v398 = vld [vmem:[%s315 + $0x8] sm:$0xff]
      %v399 = vld [vmem:[%s1] sm:$0xf]
      %401 = vset.pattern.permute.xlu0 1
      %402 = vperm.xlu0 %401, %v399
      %v403 = vpop.permute.xlu0 %402
      %v405 = vunpack.c.l.s4 839922192
      %v406 = vunpack.c.0.s8 %v405
      %v407 = vperm.slane %v403, %v406
      %v409 = vmul.f32 %v397, %v407
      %v410 = vmul.f32 %v398, %v407
      %413 = vst [vmem:[#allocation1] ss:$2 sm:$0xff] %v409
      %s414 = scalar_lea.vmem [#allocation1], 16
      %415 = vst [vmem:[%s414] ss:$2 sm:$0xff] %v410
      %v416 = vld.sshfl [vmem:[#allocation1] sm:$0xff pattern:$0x75316420]
      %v417 = vld.sshfl [vmem:[#allocation1 + $0x8] sm:$0xff pattern:$0x75316420]
      %v418 = vld.sshfl [vmem:[#allocation1 + $0x10] sm:$0xff pattern:$0x75316420]
      %v419 = vld.sshfl [vmem:[#allocation1 + $0x18] sm:$0xff pattern:$0x75316420]
      %420 = vrot.lane.b32.xlu0 %v416, 127
      %v421 = vpop.permute.xlu0 %420
      %422 = vrot.lane.b32.xlu0 %v417, 127
      %v423 = vpop.permute.xlu0 %422
      %424 = vrot.lane.b32.xlu0 %v418, 127
      %v425 = vpop.permute.xlu0 %424
      %426 = vrot.lane.b32.xlu0 %v419, 127
      %v427 = vpop.permute.xlu0 %426
      %vm428 = vcmask 1039360
      %v429 = vsel %vm428, %v421, %v423
      %v430 = vsel %vm428, %v423, %v425
      %v431 = vsel %vm428, %v425, %v427
      %v435 = vadd.f32 %v368, %v429
      %v436 = vadd.f32 %v369, %v430
      %v437 = vadd.f32 %v370, %v431
      %v438 = vld [vmem:[%s2] sm:$0xf]
      %440 = vset.pattern.permute.xlu0 1
      %441 = vperm.xlu0 %440, %v438
      %v442 = vpop.permute.xlu0 %441
      %v444 = vunpack.c.l.s4 839922192
      %v445 = vunpack.c.0.s8 %v444
      %v446 = vperm.slane %v442, %v445
      %v448 = vmul.f32 %v397, %v446
      %v449 = vmul.f32 %v398, %v446
      %452 = vst [vmem:[#allocation1] ss:$2 sm:$0xff] %v448
      %s453 = scalar_lea.vmem [#allocation1], 16
      %454 = vst [vmem:[%s453] ss:$2 sm:$0xff] %v449
      %v455 = vld.sshfl [vmem:[#allocation1] sm:$0xff pattern:$0x75316420]
      %v456 = vld.sshfl [vmem:[#allocation1 + $0x8] sm:$0xff pattern:$0x75316420]
      %v457 = vld.sshfl [vmem:[#allocation1 + $0x10] sm:$0xff pattern:$0x75316420]
      %v458 = vld.sshfl [vmem:[#allocation1 + $0x18] sm:$0xff pattern:$0x75316420]
      %459 = vrot.lane.b32.xlu0 %v455, 127
      %v460 = vpop.permute.xlu0 %459
      %461 = vrot.lane.b32.xlu0 %v456, 127
      %v462 = vpop.permute.xlu0 %461
      %463 = vrot.lane.b32.xlu0 %v457, 127
      %v464 = vpop.permute.xlu0 %463
      %465 = vrot.lane.b32.xlu0 %v458, 127
      %v466 = vpop.permute.xlu0 %465
      %v467 = vsel %vm428, %v460, %v462
      %v468 = vsel %vm428, %v462, %v464
      %v469 = vsel %vm428, %v464, %v466
      %v473 = vadd.f32 %v394, %v467
      %v474 = vadd.f32 %v395, %v468
      %v475 = vadd.f32 %v396, %v469
      %v476 = vld [vmem:[%s315] sm:$0xff]
      %v477 = vld [vmem:[%s315 + $0x8] sm:$0xff]
      %v478 = vld [vmem:[%s1] sm:$0xf]
      %480 = vset.pattern.permute.xlu0 2
      %481 = vperm.xlu0 %480, %v478
      %v482 = vpop.permute.xlu0 %481
      %v484 = vunpack.c.l.s4 839922192
      %v485 = vunpack.c.0.s8 %v484
      %v486 = vperm.slane %v482, %v485
      %v488 = vmul.f32 %v476, %v486
      %v489 = vmul.f32 %v477, %v486
      %492 = vst [vmem:[#allocation1] ss:$2 sm:$0xff] %v488
      %s493 = scalar_lea.vmem [#allocation1], 16
      %494 = vst [vmem:[%s493] ss:$2 sm:$0xff] %v489
      %v495 = vld.sshfl [vmem:[#allocation1] sm:$0xff pattern:$0x75316420]
      %v496 = vld.sshfl [vmem:[#allocation1 + $0x8] sm:$0xff pattern:$0x75316420]
      %v497 = vld.sshfl [vmem:[#allocation1 + $0x10] sm:$0xff pattern:$0x75316420]
      %v498 = vld.sshfl [vmem:[#allocation1 + $0x18] sm:$0xff pattern:$0x75316420]
      %499 = vrot.lane.b32.xlu0 %v495, 126
      %v500 = vpop.permute.xlu0 %499
      %501 = vrot.lane.b32.xlu0 %v496, 126
      %v502 = vpop.permute.xlu0 %501
      %503 = vrot.lane.b32.xlu0 %v497, 126
      %v504 = vpop.permute.xlu0 %503
      %505 = vrot.lane.b32.xlu0 %v498, 126
      %v506 = vpop.permute.xlu0 %505
      %vm507 = vcmask 1031168
      %v508 = vsel %vm507, %v500, %v502
      %v509 = vsel %vm507, %v502, %v504
      %v510 = vsel %vm507, %v504, %v506
      %v514 = vadd.f32 %v435, %v508
      %v515 = vadd.f32 %v436, %v509
      %v516 = vadd.f32 %v437, %v510
      %v517 = vld [vmem:[%s2] sm:$0xf]
      %519 = vset.pattern.permute.xlu0 2
      %520 = vperm.xlu0 %519, %v517
      %v521 = vpop.permute.xlu0 %520
      %v523 = vunpack.c.l.s4 839922192
      %v524 = vunpack.c.0.s8 %v523
      %v525 = vperm.slane %v521, %v524
      %v527 = vmul.f32 %v476, %v525
      %v528 = vmul.f32 %v477, %v525
      %531 = vst [vmem:[#allocation1] ss:$2 sm:$0xff] %v527
      %s532 = scalar_lea.vmem [#allocation1], 16
      %533 = vst [vmem:[%s532] ss:$2 sm:$0xff] %v528
      %v534 = vld.sshfl [vmem:[#allocation1] sm:$0xff pattern:$0x75316420]
      %v535 = vld.sshfl [vmem:[#allocation1 + $0x8] sm:$0xff pattern:$0x75316420]
      %v536 = vld.sshfl [vmem:[#allocation1 + $0x10] sm:$0xff pattern:$0x75316420]
      %v537 = vld.sshfl [vmem:[#allocation1 + $0x18] sm:$0xff pattern:$0x75316420]
      %538 = vrot.lane.b32.xlu0 %v534, 126
      %v539 = vpop.permute.xlu0 %538
      %540 = vrot.lane.b32.xlu0 %v535, 126
      %v541 = vpop.permute.xlu0 %540
      %542 = vrot.lane.b32.xlu0 %v536, 126
      %v543 = vpop.permute.xlu0 %542
      %544 = vrot.lane.b32.xlu0 %v537, 126
      %v545 = vpop.permute.xlu0 %544
      %v546 = vsel %vm507, %v539, %v541
      %v547 = vsel %vm507, %v541, %v543
      %v548 = vsel %vm507, %v543, %v545
      %v552 = vadd.f32 %v473, %v546
      %v553 = vadd.f32 %v474, %v547
      %v554 = vadd.f32 %v475, %v548
      %v555 = vld [vmem:[%s315] sm:$0xff]
      %v556 = vld [vmem:[%s315 + $0x8] sm:$0xff]
      %v557 = vld [vmem:[%s1] sm:$0xf]
      %559 = vset.pattern.permute.xlu0 3
      %560 = vperm.xlu0 %559, %v557
      %v561 = vpop.permute.xlu0 %560
      %v563 = vunpack.c.l.s4 839922192
      %v564 = vunpack.c.0.s8 %v563
      %v565 = vperm.slane %v561, %v564
      %v567 = vmul.f32 %v555, %v565
      %v568 = vmul.f32 %v556, %v565
      %571 = vst [vmem:[#allocation1] ss:$2 sm:$0xff] %v567
      %s572 = scalar_lea.vmem [#allocation1], 16
      %573 = vst [vmem:[%s572] ss:$2 sm:$0xff] %v568
      %v574 = vld.sshfl [vmem:[#allocation1] sm:$0xff pattern:$0x75316420]
      %v575 = vld.sshfl [vmem:[#allocation1 + $0x8] sm:$0xff pattern:$0x75316420]
      %v576 = vld.sshfl [vmem:[#allocation1 + $0x10] sm:$0xff pattern:$0x75316420]
      %v577 = vld.sshfl [vmem:[#allocation1 + $0x18] sm:$0xff pattern:$0x75316420]
      %578 = vrot.lane.b32.xlu0 %v574, 110
      %v579 = vpop.permute.xlu0 %578
      %580 = vrot.lane.b32.xlu0 %v575, 110
      %v581 = vpop.permute.xlu0 %580
      %582 = vrot.lane.b32.xlu0 %v576, 110
      %v583 = vpop.permute.xlu0 %582
      %584 = vrot.lane.b32.xlu0 %v577, 110
      %v585 = vpop.permute.xlu0 %584
      %vm586 = vcmask 900096
      %v587 = vsel %vm586, %v579, %v581
      %v588 = vsel %vm586, %v581, %v583
      %v589 = vsel %vm586, %v583, %v585
      %v593 = vadd.f32 %v514, %v587
      %v594 = vadd.f32 %v515, %v588
      %v595 = vadd.f32 %v516, %v589
      %v596 = vld [vmem:[%s2] sm:$0xf]
      %598 = vset.pattern.permute.xlu0 3
      %599 = vperm.xlu0 %598, %v596
      %v600 = vpop.permute.xlu0 %599
      %v602 = vunpack.c.l.s4 839922192
      %v603 = vunpack.c.0.s8 %v602
      %v604 = vperm.slane %v600, %v603
      %v606 = vmul.f32 %v555, %v604
      %v607 = vmul.f32 %v556, %v604
      %610 = vst [vmem:[#allocation1] ss:$2 sm:$0xff] %v606
      %s611 = scalar_lea.vmem [#allocation1], 16
      %612 = vst [vmem:[%s611] ss:$2 sm:$0xff] %v607
      %v613 = vld.sshfl [vmem:[#allocation1] sm:$0xff pattern:$0x75316420]
      %v614 = vld.sshfl [vmem:[#allocation1 + $0x8] sm:$0xff pattern:$0x75316420]
      %v615 = vld.sshfl [vmem:[#allocation1 + $0x10] sm:$0xff pattern:$0x75316420]
      %v616 = vld.sshfl [vmem:[#allocation1 + $0x18] sm:$0xff pattern:$0x75316420]
      %617 = vrot.lane.b32.xlu0 %v613, 110
      %v618 = vpop.permute.xlu0 %617
      %619 = vrot.lane.b32.xlu0 %v614, 110
      %v620 = vpop.permute.xlu0 %619
      %621 = vrot.lane.b32.xlu0 %v615, 110
      %v622 = vpop.permute.xlu0 %621
      %623 = vrot.lane.b32.xlu0 %v616, 110
      %v624 = vpop.permute.xlu0 %623
      %v625 = vsel %vm586, %v618, %v620
      %v626 = vsel %vm586, %v620, %v622
      %v627 = vsel %vm586, %v622, %v624
      %v631 = vadd.f32 %v552, %v625
      %v632 = vadd.f32 %v553, %v626
      %v633 = vadd.f32 %v554, %v627
      %v634 = vld [vmem:[%s315] sm:$0xff]
      %v635 = vld [vmem:[%s315 + $0x8] sm:$0xff]
      %v636 = vld [vmem:[%s1] sm:$0xf]
      %638 = vset.pattern.permute.xlu0 4
      %639 = vperm.xlu0 %638, %v636
      %v640 = vpop.permute.xlu0 %639
      %v642 = vunpack.c.l.s4 839922192
      %v643 = vunpack.c.0.s8 %v642
      %v644 = vperm.slane %v640, %v643
      %v646 = vmul.f32 %v634, %v644
      %v647 = vmul.f32 %v635, %v644
      %650 = vst [vmem:[#allocation1] ss:$2 sm:$0xff] %v646
      %s651 = scalar_lea.vmem [#allocation1], 16
      %652 = vst [vmem:[%s651] ss:$2 sm:$0xff] %v647
      %v653 = vld.sshfl [vmem:[#allocation1] sm:$0xff pattern:$0x75316420]
      %v654 = vld.sshfl [vmem:[#allocation1 + $0x8] sm:$0xff pattern:$0x75316420]
      %v655 = vld.sshfl [vmem:[#allocation1 + $0x10] sm:$0xff pattern:$0x75316420]
      %v656 = vld.sshfl [vmem:[#allocation1 + $0x18] sm:$0xff pattern:$0x75316420]
      %657 = vrot.lane.b32.xlu0 %v653, 109
      %v658 = vpop.permute.xlu0 %657
      %659 = vrot.lane.b32.xlu0 %v654, 109
      %v660 = vpop.permute.xlu0 %659
      %661 = vrot.lane.b32.xlu0 %v655, 109
      %v662 = vpop.permute.xlu0 %661
      %663 = vrot.lane.b32.xlu0 %v656, 109
      %v664 = vpop.permute.xlu0 %663
      %vm665 = vcmask 891904
      %v666 = vsel %vm665, %v658, %v660
      %v667 = vsel %vm665, %v660, %v662
      %v668 = vsel %vm665, %v662, %v664
      %v672 = vadd.f32 %v593, %v666
      %v673 = vadd.f32 %v594, %v667
      %v674 = vadd.f32 %v595, %v668
      %v675 = vld [vmem:[%s2] sm:$0xf]
      %677 = vset.pattern.permute.xlu0 4
      %678 = vperm.xlu0 %677, %v675
      %v679 = vpop.permute.xlu0 %678
      %v681 = vunpack.c.l.s4 839922192
      %v682 = vunpack.c.0.s8 %v681
      %v683 = vperm.slane %v679, %v682
      %v685 = vmul.f32 %v634, %v683
      %v686 = vmul.f32 %v635, %v683
      %689 = vst [vmem:[#allocation1] ss:$2 sm:$0xff] %v685
      %s690 = scalar_lea.vmem [#allocation1], 16
      %691 = vst [vmem:[%s690] ss:$2 sm:$0xff] %v686
      %v692 = vld.sshfl [vmem:[#allocation1] sm:$0xff pattern:$0x75316420]
      %v693 = vld.sshfl [vmem:[#allocation1 + $0x8] sm:$0xff pattern:$0x75316420]
      %v694 = vld.sshfl [vmem:[#allocation1 + $0x10] sm:$0xff pattern:$0x75316420]
      %v695 = vld.sshfl [vmem:[#allocation1 + $0x18] sm:$0xff pattern:$0x75316420]
      %696 = vrot.lane.b32.xlu0 %v692, 109
      %v697 = vpop.permute.xlu0 %696
      %698 = vrot.lane.b32.xlu0 %v693, 109
      %v699 = vpop.permute.xlu0 %698
      %700 = vrot.lane.b32.xlu0 %v694, 109
      %v701 = vpop.permute.xlu0 %700
      %702 = vrot.lane.b32.xlu0 %v695, 109
      %v703 = vpop.permute.xlu0 %702
      %v704 = vsel %vm665, %v697, %v699
      %v705 = vsel %vm665, %v699, %v701
      %v706 = vsel %vm665, %v701, %v703
      %v710 = vadd.f32 %v631, %v704
      %v711 = vadd.f32 %v632, %v705
      %v712 = vadd.f32 %v633, %v706
      %v713 = vld [vmem:[%s315] sm:$0xff]
      %v714 = vld [vmem:[%s315 + $0x8] sm:$0xff]
      %v715 = vld [vmem:[%s1] sm:$0xf]
      %717 = vset.pattern.permute.xlu0 5
      %718 = vperm.xlu0 %717, %v715
      %v719 = vpop.permute.xlu0 %718
      %v721 = vunpack.c.l.s4 839922192
      %v722 = vunpack.c.0.s8 %v721
      %v723 = vperm.slane %v719, %v722
      %v725 = vmul.f32 %v713, %v723
      %v726 = vmul.f32 %v714, %v723
      %729 = vst [vmem:[#allocation1] ss:$2 sm:$0xff] %v725
      %s730 = scalar_lea.vmem [#allocation1], 16
      %731 = vst [vmem:[%s730] ss:$2 sm:$0xff] %v726
      %v732 = vld.sshfl [vmem:[#allocation1] sm:$0xff pattern:$0x75316420]
      %v733 = vld.sshfl [vmem:[#allocation1 + $0x8] sm:$0xff pattern:$0x75316420]
      %v734 = vld.sshfl [vmem:[#allocation1 + $0x10] sm:$0xff pattern:$0x75316420]
      %v735 = vld.sshfl [vmem:[#allocation1 + $0x18] sm:$0xff pattern:$0x75316420]
      %736 = vrot.lane.b32.xlu0 %v732, 108
      %v737 = vpop.permute.xlu0 %736
      %738 = vrot.lane.b32.xlu0 %v733, 108
      %v739 = vpop.permute.xlu0 %738
      %740 = vrot.lane.b32.xlu0 %v734, 108
      %v741 = vpop.permute.xlu0 %740
      %742 = vrot.lane.b32.xlu0 %v735, 108
      %v743 = vpop.permute.xlu0 %742
      %vm744 = vcmask 883712
      %v745 = vsel %vm744, %v737, %v739
      %v746 = vsel %vm744, %v739, %v741
      %v747 = vsel %vm744, %v741, %v743
      %v751 = vadd.f32 %v672, %v745
      %v752 = vadd.f32 %v673, %v746
      %v753 = vadd.f32 %v674, %v747
      %v754 = vld [vmem:[%s2] sm:$0xf]
      %756 = vset.pattern.permute.xlu0 5
      %757 = vperm.xlu0 %756, %v754
      %v758 = vpop.permute.xlu0 %757
      %v760 = vunpack.c.l.s4 839922192
      %v761 = vunpack.c.0.s8 %v760
      %v762 = vperm.slane %v758, %v761
      %v764 = vmul.f32 %v713, %v762
      %v765 = vmul.f32 %v714, %v762
      %768 = vst [vmem:[#allocation1] ss:$2 sm:$0xff] %v764
      %s769 = scalar_lea.vmem [#allocation1], 16
      %770 = vst [vmem:[%s769] ss:$2 sm:$0xff] %v765
      %v771 = vld.sshfl [vmem:[#allocation1] sm:$0xff pattern:$0x75316420]
      %v772 = vld.sshfl [vmem:[#allocation1 + $0x8] sm:$0xff pattern:$0x75316420]
      %v773 = vld.sshfl [vmem:[#allocation1 + $0x10] sm:$0xff pattern:$0x75316420]
      %v774 = vld.sshfl [vmem:[#allocation1 + $0x18] sm:$0xff pattern:$0x75316420]
      %775 = vrot.lane.b32.xlu0 %v771, 108
      %v776 = vpop.permute.xlu0 %775
      %777 = vrot.lane.b32.xlu0 %v772, 108
      %v778 = vpop.permute.xlu0 %777
      %779 = vrot.lane.b32.xlu0 %v773, 108
      %v780 = vpop.permute.xlu0 %779
      %781 = vrot.lane.b32.xlu0 %v774, 108
      %v782 = vpop.permute.xlu0 %781
      %v783 = vsel %vm744, %v776, %v778
      %v784 = vsel %vm744, %v778, %v780
      %v785 = vsel %vm744, %v780, %v782
      %v789 = vadd.f32 %v710, %v783
      %v790 = vadd.f32 %v711, %v784
      %v791 = vadd.f32 %v712, %v785
      %v792 = vld [vmem:[%s315] sm:$0xff]
      %v793 = vld [vmem:[%s315 + $0x8] sm:$0xff]
      %v794 = vld [vmem:[%s1] sm:$0xf]
      %796 = vset.pattern.permute.xlu0 6
      %797 = vperm.xlu0 %796, %v794
      %v798 = vpop.permute.xlu0 %797
      %v800 = vunpack.c.l.s4 839922192
      %v801 = vunpack.c.0.s8 %v800
      %v802 = vperm.slane %v798, %v801
      %v804 = vmul.f32 %v792, %v802
      %v805 = vmul.f32 %v793, %v802
      %808 = vst [vmem:[#allocation1] ss:$2 sm:$0xff] %v804
      %s809 = scalar_lea.vmem [#allocation1], 16
      %810 = vst [vmem:[%s809] ss:$2 sm:$0xff] %v805
      %v811 = vld.sshfl [vmem:[#allocation1] sm:$0xff pattern:$0x75316420]
      %v812 = vld.sshfl [vmem:[#allocation1 + $0x8] sm:$0xff pattern:$0x75316420]
      %v813 = vld.sshfl [vmem:[#allocation1 + $0x10] sm:$0xff pattern:$0x75316420]
      %v814 = vld.sshfl [vmem:[#allocation1 + $0x18] sm:$0xff pattern:$0x75316420]
      %815 = vrot.lane.b32.xlu0 %v811, 92
      %v816 = vpop.permute.xlu0 %815
      %817 = vrot.lane.b32.xlu0 %v812, 92
      %v818 = vpop.permute.xlu0 %817
      %819 = vrot.lane.b32.xlu0 %v813, 92
      %v820 = vpop.permute.xlu0 %819
      %821 = vrot.lane.b32.xlu0 %v814, 92
      %v822 = vpop.permute.xlu0 %821
      %vm823 = vcmask 752640
      %v824 = vsel %vm823, %v816, %v818
      %v825 = vsel %vm823, %v818, %v820
      %v826 = vsel %vm823, %v820, %v822
      %v830 = vadd.f32 %v751, %v824
      %v831 = vadd.f32 %v752, %v825
      %v832 = vadd.f32 %v753, %v826
      %v833 = vld [vmem:[%s2] sm:$0xf]
      %835 = vset.pattern.permute.xlu0 6
      %836 = vperm.xlu0 %835, %v833
      %v837 = vpop.permute.xlu0 %836
      %v839 = vunpack.c.l.s4 839922192
      %v840 = vunpack.c.0.s8 %v839
      %v841 = vperm.slane %v837, %v840
      %v843 = vmul.f32 %v792, %v841
      %v844 = vmul.f32 %v793, %v841
      %847 = vst [vmem:[#allocation1] ss:$2 sm:$0xff] %v843
      %s848 = scalar_lea.vmem [#allocation1], 16
      %849 = vst [vmem:[%s848] ss:$2 sm:$0xff] %v844
      %v850 = vld.sshfl [vmem:[#allocation1] sm:$0xff pattern:$0x75316420]
      %v851 = vld.sshfl [vmem:[#allocation1 + $0x8] sm:$0xff pattern:$0x75316420]
      %v852 = vld.sshfl [vmem:[#allocation1 + $0x10] sm:$0xff pattern:$0x75316420]
      %v853 = vld.sshfl [vmem:[#allocation1 + $0x18] sm:$0xff pattern:$0x75316420]
      %854 = vrot.lane.b32.xlu0 %v850, 92
      %v855 = vpop.permute.xlu0 %854
      %856 = vrot.lane.b32.xlu0 %v851, 92
      %v857 = vpop.permute.xlu0 %856
      %858 = vrot.lane.b32.xlu0 %v852, 92
      %v859 = vpop.permute.xlu0 %858
      %860 = vrot.lane.b32.xlu0 %v853, 92
      %v861 = vpop.permute.xlu0 %860
      %v862 = vsel %vm823, %v855, %v857
      %v863 = vsel %vm823, %v857, %v859
      %v864 = vsel %vm823, %v859, %v861
      %v868 = vadd.f32 %v789, %v862
      %v869 = vadd.f32 %v790, %v863
      %v870 = vadd.f32 %v791, %v864
      %v871 = vld [vmem:[%s315] sm:$0xff]
      %v872 = vld [vmem:[%s315 + $0x8] sm:$0xff]
      %v873 = vld [vmem:[%s1] sm:$0xf]
      %875 = vset.pattern.permute.xlu0 7
      %876 = vperm.xlu0 %875, %v873
      %v877 = vpop.permute.xlu0 %876
      %v879 = vunpack.c.l.s4 839922192
      %v880 = vunpack.c.0.s8 %v879
      %v881 = vperm.slane %v877, %v880
      %v883 = vmul.f32 %v871, %v881
      %v884 = vmul.f32 %v872, %v881
      %887 = vst [vmem:[#allocation1] ss:$2 sm:$0xff] %v883
      %s888 = scalar_lea.vmem [#allocation1], 16
      %889 = vst [vmem:[%s888] ss:$2 sm:$0xff] %v884
      %v890 = vld.sshfl [vmem:[#allocation1] sm:$0xff pattern:$0x75316420]
      %v891 = vld.sshfl [vmem:[#allocation1 + $0x8] sm:$0xff pattern:$0x75316420]
      %v892 = vld.sshfl [vmem:[#allocation1 + $0x10] sm:$0xff pattern:$0x75316420]
      %v893 = vld.sshfl [vmem:[#allocation1 + $0x18] sm:$0xff pattern:$0x75316420]
      %894 = vrot.lane.b32.xlu0 %v890, 91
      %v895 = vpop.permute.xlu0 %894
      %896 = vrot.lane.b32.xlu0 %v891, 91
      %v897 = vpop.permute.xlu0 %896
      %898 = vrot.lane.b32.xlu0 %v892, 91
      %v899 = vpop.permute.xlu0 %898
      %900 = vrot.lane.b32.xlu0 %v893, 91
      %v901 = vpop.permute.xlu0 %900
      %vm902 = vcmask 744448
      %v903 = vsel %vm902, %v895, %v897
      %v904 = vsel %vm902, %v897, %v899
      %v905 = vsel %vm902, %v899, %v901
      %v909 = vadd.f32 %v830, %v903
      %v910 = vadd.f32 %v831, %v904
      %v911 = vadd.f32 %v832, %v905
      %v912 = vld [vmem:[%s2] sm:$0xf]
      %914 = vset.pattern.permute.xlu0 7
      %915 = vperm.xlu0 %914, %v912
      %v916 = vpop.permute.xlu0 %915
      %v918 = vunpack.c.l.s4 839922192
      %v919 = vunpack.c.0.s8 %v918
      %v920 = vperm.slane %v916, %v919
      %v922 = vmul.f32 %v871, %v920
      %v923 = vmul.f32 %v872, %v920
      %926 = vst [vmem:[#allocation1] ss:$2 sm:$0xff] %v922
      %s927 = scalar_lea.vmem [#allocation1], 16
      %928 = vst [vmem:[%s927] ss:$2 sm:$0xff] %v923
      %v929 = vld.sshfl [vmem:[#allocation1] sm:$0xff pattern:$0x75316420]
      %v930 = vld.sshfl [vmem:[#allocation1 + $0x8] sm:$0xff pattern:$0x75316420]
      %v931 = vld.sshfl [vmem:[#allocation1 + $0x10] sm:$0xff pattern:$0x75316420]
      %v932 = vld.sshfl [vmem:[#allocation1 + $0x18] sm:$0xff pattern:$0x75316420]
      %933 = vrot.lane.b32.xlu0 %v929, 91
      %v934 = vpop.permute.xlu0 %933
      %935 = vrot.lane.b32.xlu0 %v930, 91
      %v936 = vpop.permute.xlu0 %935
      %937 = vrot.lane.b32.xlu0 %v931, 91
      %v938 = vpop.permute.xlu0 %937
      %939 = vrot.lane.b32.xlu0 %v932, 91
      %v940 = vpop.permute.xlu0 %939
      %v941 = vsel %vm902, %v934, %v936
      %v942 = vsel %vm902, %v936, %v938
      %v943 = vsel %vm902, %v938, %v940
      %v947 = vadd.f32 %v868, %v941
      %v948 = vadd.f32 %v869, %v942
      %v949 = vadd.f32 %v870, %v943
      %v950 = vld [vmem:[%s315] sm:$0xff]
      %v951 = vld [vmem:[%s315 + $0x8] sm:$0xff]
      %v952 = vld [vmem:[%s1] sm:$0xf]
      %954 = vset.pattern.permute.xlu0 8
      %955 = vperm.xlu0 %954, %v952
      %v956 = vpop.permute.xlu0 %955
      %v958 = vunpack.c.l.s4 839922192
      %v959 = vunpack.c.0.s8 %v958
      %v960 = vperm.slane %v956, %v959
      %v962 = vmul.f32 %v950, %v960
      %v963 = vmul.f32 %v951, %v960
      %966 = vst [vmem:[#allocation1] ss:$2 sm:$0xff] %v962
      %s967 = scalar_lea.vmem [#allocation1], 16
      %968 = vst [vmem:[%s967] ss:$2 sm:$0xff] %v963
      %v969 = vld.sshfl [vmem:[#allocation1] sm:$0xff pattern:$0x75316420]
      %v970 = vld.sshfl [vmem:[#allocation1 + $0x8] sm:$0xff pattern:$0x75316420]
      %v971 = vld.sshfl [vmem:[#allocation1 + $0x10] sm:$0xff pattern:$0x75316420]
      %v972 = vld.sshfl [vmem:[#allocation1 + $0x18] sm:$0xff pattern:$0x75316420]
      %973 = vrot.lane.b32.xlu0 %v969, 90
      %v974 = vpop.permute.xlu0 %973
      %975 = vrot.lane.b32.xlu0 %v970, 90
      %v976 = vpop.permute.xlu0 %975
      %977 = vrot.lane.b32.xlu0 %v971, 90
      %v978 = vpop.permute.xlu0 %977
      %979 = vrot.lane.b32.xlu0 %v972, 90
      %v980 = vpop.permute.xlu0 %979
      %vm981 = vcmask 736256
      %v982 = vsel %vm981, %v974, %v976
      %v983 = vsel %vm981, %v976, %v978
      %v984 = vsel %vm981, %v978, %v980
      %v988 = vadd.f32 %v909, %v982
      %v989 = vadd.f32 %v910, %v983
      %v990 = vadd.f32 %v911, %v984
      %v991 = vld [vmem:[%s2] sm:$0xf]
      %993 = vset.pattern.permute.xlu0 8
      %994 = vperm.xlu0 %993, %v991
      %v995 = vpop.permute.xlu0 %994
      %v997 = vunpack.c.l.s4 839922192
      %v998 = vunpack.c.0.s8 %v997
      %v999 = vperm.slane %v995, %v998
      %v1001 = vmul.f32 %v950, %v999
      %v1002 = vmul.f32 %v951, %v999
      %1005 = vst [vmem:[#allocation1] ss:$2 sm:$0xff] %v1001
      %s1006 = scalar_lea.vmem [#allocation1], 16
      %1007 = vst [vmem:[%s1006] ss:$2 sm:$0xff] %v1002
      %v1008 = vld.sshfl [vmem:[#allocation1] sm:$0xff pattern:$0x75316420]
      %v1009 = vld.sshfl [vmem:[#allocation1 + $0x8] sm:$0xff pattern:$0x75316420]
      %v1010 = vld.sshfl [vmem:[#allocation1 + $0x10] sm:$0xff pattern:$0x75316420]
      %v1011 = vld.sshfl [vmem:[#allocation1 + $0x18] sm:$0xff pattern:$0x75316420]
      %1012 = vrot.lane.b32.xlu0 %v1008, 90
      %v1013 = vpop.permute.xlu0 %1012
      %1014 = vrot.lane.b32.xlu0 %v1009, 90
      %v1015 = vpop.permute.xlu0 %1014
      %1016 = vrot.lane.b32.xlu0 %v1010, 90
      %v1017 = vpop.permute.xlu0 %1016
      %1018 = vrot.lane.b32.xlu0 %v1011, 90
      %v1019 = vpop.permute.xlu0 %1018
      %v1020 = vsel %vm981, %v1013, %v1015
      %v1021 = vsel %vm981, %v1015, %v1017
      %v1022 = vsel %vm981, %v1017, %v1019
      %v1026 = vadd.f32 %v947, %v1020
      %v1027 = vadd.f32 %v948, %v1021
      %v1028 = vadd.f32 %v949, %v1022
      %v1031 = vrot.slane %v989, 4
      %vm1032 = vcmask 1043456
      %v1033 = vsel %vm1032, %v988, %v1031
      %1035 = vst [vmem:[%s320] sm:$0xff] %v1033
      %1036 = vst [vmem:[%s320 + $0x8] sm:$0xf] %v990
      %v1039 = vrot.slane %v1027, 4
      %v1040 = vsel %vm1032, %v1026, %v1039
      %1042 = vst [vmem:[%s325] sm:$0xff] %v1040
      %1043 = vst [vmem:[%s325 + $0x8] sm:$0xf] %v1028
      %v1044 = vld [vmem:[%s5] sm:$0xf]
      %1047 = vst [vmem:[#allocation1] ss:$2 sm:$0xff] %v634
      %s1048 = scalar_lea.vmem [#allocation1], 16
      %1049 = vst [vmem:[%s1048] ss:$2 sm:$0xff] %v635
      %v1050 = vld.sshfl [vmem:[#allocation1] sm:$0xff pattern:$0x75316420]
      %v1051 = vld.sshfl [vmem:[#allocation1 + $0x8] sm:$0xff pattern:$0x75316420]
      %v1052 = vld.sshfl [vmem:[#allocation1 + $0x10] sm:$0xff pattern:$0x75316420]
      %v1053 = vld.sshfl [vmem:[#allocation1 + $0x18] sm:$0xff pattern:$0x75316420]
      %1054 = vrot.lane.b32.xlu0 %v1050, 109
      %v1055 = vpop.permute.xlu0 %1054
      %1056 = vrot.lane.b32.xlu0 %v1051, 109
      %v1057 = vpop.permute.xlu0 %1056
      %1058 = vrot.lane.b32.xlu0 %v1052, 109
      %v1059 = vpop.permute.xlu0 %1058
      %1060 = vrot.lane.b32.xlu0 %v1053, 109
      %v1061 = vpop.permute.xlu0 %1060
      %v1062 = vsel %vm665, %v1055, %v1057
      %v1063 = vsel %vm665, %v1057, %v1059
      %v1064 = vsel %vm665, %v1059, %v1061
      %vm1065 = vcmask 31744
      %v1067 = vsel %vm1065, %v1044, 0
      %v1069 = vsel %vm1032, %v1062, 0
      %v1071 = vsel %vm1032, %v1063, 0
      %v1073 = vsel %vm1032, %v1064, 0
      %1075 = vmatpush.msra.mxu0 0.0
      %1076 = vmatpush.msra.mxu0 0.0
      %1077 = vmatpush.msra.mxu0 0.0
      %1078 = vmatpush.msra.mxu0 0.0
      %1079 = vmatpush.msra.mxu0 0.0
      %1080 = vmatpush.msra.mxu0 0.0
      %1081 = vmatpush.msra.mxu0 0.0
      %1082 = vmatpush.msra.mxu0 0.0
      %1083 = vmatpush.msra.mxu0 0.0
      %1084 = vmatpush.msra.mxu0 0.0
      %1085 = vmatpush.msra.mxu0 0.0
      %1086 = vmatpush.msra.mxu0 0.0
      %1087 = vmatpush.msra.mxu0 0.0
      %1088 = vmatpush.msra.mxu0 0.0
      %1089 = vmatpush.msra.mxu0 0.0
      %1090 = vmatpush.msra.mxu0 %v1069
      %1091 = vmatmul.f32.gmra.mxu0 %v1067
      %v1092 = vpop.f32.mrf.mxu0
      %v1093 = vadd.f32 0.0, %v1092
      %1094 = vdwg.mxu0
      %1095 = vmatpush.msra.mxu0 0.0
      %1096 = vmatpush.msra.mxu0 0.0
      %1097 = vmatpush.msra.mxu0 0.0
      %1098 = vmatpush.msra.mxu0 0.0
      %1099 = vmatpush.msra.mxu0 0.0
      %1100 = vmatpush.msra.mxu0 0.0
      %1101 = vmatpush.msra.mxu0 0.0
      %1102 = vmatpush.msra.mxu0 0.0
      %1103 = vmatpush.msra.mxu0 0.0
      %1104 = vmatpush.msra.mxu0 0.0
      %1105 = vmatpush.msra.mxu0 0.0
      %1106 = vmatpush.msra.mxu0 0.0
      %1107 = vmatpush.msra.mxu0 0.0
      %1108 = vmatpush.msra.mxu0 0.0
      %1109 = vmatpush.msra.mxu0 0.0
      %1110 = vmatpush.msra.mxu0 %v1071
      %1111 = vmatmul.f32.gmra.mxu0 %v1067
      %v1112 = vpop.f32.mrf.mxu0
      %v1113 = vadd.f32 0.0, %v1112
      %1114 = vdwg.mxu0
      %1115 = vmatpush.msra.mxu0 0.0
      %1116 = vmatpush.msra.mxu0 0.0
      %1117 = vmatpush.msra.mxu0 0.0
      %1118 = vmatpush.msra.mxu0 0.0
      %1119 = vmatpush.msra.mxu0 0.0
      %1120 = vmatpush.msra.mxu0 0.0
      %1121 = vmatpush.msra.mxu0 0.0
      %1122 = vmatpush.msra.mxu0 0.0
      %1123 = vmatpush.msra.mxu0 0.0
      %1124 = vmatpush.msra.mxu0 0.0
      %1125 = vmatpush.msra.mxu0 0.0
      %1126 = vmatpush.msra.mxu0 0.0
      %1127 = vmatpush.msra.mxu0 0.0
      %1128 = vmatpush.msra.mxu0 0.0
      %1129 = vmatpush.msra.mxu0 0.0
      %1130 = vmatpush.msra.mxu0 %v1073
      %1131 = vmatmul.f32.gmra.mxu0 %v1067
      %v1132 = vpop.f32.mrf.mxu0
      %v1133 = vadd.f32 0.0, %v1132
      %1134 = vdwg.mxu0
      %v1137 = vrot.slane %v1113, 4
      %v1138 = vsel %vm1032, %v1093, %v1137
      %1140 = vst [vmem:[%s330] sm:$0xff] %v1138
      %1141 = vst [vmem:[%s330 + $0x8] sm:$0xf] %v1133
      %p1142 = scmp.lt.s32.totalorder %s20, 1
      %s1143 = scalar_select %p1142, %s20, 1
      %s1144 = smul.addr %s1143, 3
      %s1145 = smul.addr %s1144, 4
      %s1146 = scalar_lea.vmem %s6, %s1145
      %p1147 = scmp.lt.s32.totalorder %s20, 1
      %s1148 = scalar_select %p1147, %s20, 1
      %s1149 = smul.addr %s1148, 3
      %s1150 = smul.addr %s1149, 4
      %s1151 = scalar_lea.vmem %s7, %s1150
      %p1152 = scmp.lt.s32.totalorder %s20, 1
      %s1153 = scalar_select %p1152, %s20, 1
      %s1154 = smul.addr %s1153, 3
      %s1155 = smul.addr %s1154, 4
      %s1156 = scalar_lea.vmem %s8, %s1155
      // Predicated region
      $region45: #{pmpa3_ave_forward.2} parent=43 // pred_check
        %p1157 = pneg %p169
      $region46: #{pmpa3_ave_forward.2} parent=43 // pred_check_branch
        %1159 = sbr.rel (%p1157) target = $region48
      $region47: #{pmpa3_ave_forward.2} parent=43 // pred_region
        _
      $region48: #{pmpa3_ave_forward.2} parent=43 // pred_fallthru
        _
      // Predicated region
      $region49: #{pmpa3_ave_forward.2} parent=43 // pred_check
        %p1160 = pneg %p195
      $region50: #{pmpa3_ave_forward.2} parent=43 // pred_check_branch
        %1162 = sbr.rel (%p1160) target = $region52
      $region51: #{pmpa3_ave_forward.2} parent=43 // pred_region
        _
      $region52: #{pmpa3_ave_forward.2} parent=43 // pred_fallthru
        _
      // Predicated region
      $region53: #{pmpa3_ave_forward.2} parent=43 // pred_check
        %p1163 = pneg %p221
      $region54: #{pmpa3_ave_forward.2} parent=43 // pred_check_branch
        %1165 = sbr.rel (%p1163) target = $region56
      $region55: #{pmpa3_ave_forward.2} parent=43 // pred_region
        _
      $region56: #{pmpa3_ave_forward.2} parent=43 // pred_fallthru
        _
    $region44: #{pmpa3_ave_forward.2} parent=5 // pred_fallthru
      _
    %p1166 = scmp.le.s32.totalorder 2, %s15
    // Predicated region
    $region57: #{pmpa3_ave_forward.2} parent=5 // pred_check
      %p1167 = pneg %p1166
    $region58: #{pmpa3_ave_forward.2} parent=5 // pred_check_branch
      %1169 = sbr.rel (%p1167) target = $region60
    $region59: #{pmpa3_ave_forward.2} parent=5 // pred_region
      %s1170 = ssub.s32 %s15, 2
      // Predicated region
      $region61: #{pmpa3_ave_forward.2} parent=59 // pred_check
        %p1171 = pneg %p175
      $region62: #{pmpa3_ave_forward.2} parent=59 // pred_check_branch
        %1173 = sbr.rel (%p1171) target = $region64
      $region63: #{pmpa3_ave_forward.2} parent=59 // pred_region
        %p1174 = scmp.lt.s32.totalorder %s21, 1
        %s1175 = scalar_select %p1174, %s21, 1
        %s1176 = smul.addr %s1175, 3
        %s1177 = smul.addr %s1176, 4
        %s1178 = scalar_lea.vmem %s6, %s1177
      $region64: #{pmpa3_ave_forward.2} parent=59 // pred_fallthru
        _
      // Predicated region
      $region65: #{pmpa3_ave_forward.2} parent=59 // pred_check
        %p1179 = pneg %p201
      $region66: #{pmpa3_ave_forward.2} parent=59 // pred_check_branch
        %1181 = sbr.rel (%p1179) target = $region68
      $region67: #{pmpa3_ave_forward.2} parent=59 // pred_region
        %p1182 = scmp.lt.s32.totalorder %s21, 1
        %s1183 = scalar_select %p1182, %s21, 1
        %s1184 = smul.addr %s1183, 3
        %s1185 = smul.addr %s1184, 4
        %s1186 = scalar_lea.vmem %s7, %s1185
      $region68: #{pmpa3_ave_forward.2} parent=59 // pred_fallthru
        _
      // Predicated region
      $region69: #{pmpa3_ave_forward.2} parent=59 // pred_check
        %p1187 = pneg %p227
      $region70: #{pmpa3_ave_forward.2} parent=59 // pred_check_branch
        %1189 = sbr.rel (%p1187) target = $region72
      $region71: #{pmpa3_ave_forward.2} parent=59 // pred_region
        %p1190 = scmp.lt.s32.totalorder %s21, 1
        %s1191 = scalar_select %p1190, %s21, 1
        %s1192 = smul.addr %s1191, 3
        %s1193 = smul.addr %s1192, 4
        %s1194 = scalar_lea.vmem %s8, %s1193
      $region72: #{pmpa3_ave_forward.2} parent=59 // pred_fallthru
        _
    $region60: #{pmpa3_ave_forward.2} parent=5 // pred_fallthru
      _
  $region6: #{pmpa3_ave_forward.2} parent=0 // loop_footer
    %s19 = sadd.s32 1, %s15
  $region7: #{pmpa3_ave_forward.2} parent=0 // loop_footer_branch
    %14 = sbr.rel target = $region3
  $region8: #{pmpa3_ave_forward.2} parent=0 // loop_exit
    _

</llo_original>
